<compile_context>
chip_gen: v5e
topology: v5e:2x2
jax: 0.10.0
libtpu: 0.0.40
codegen_flags: <defaults>
</compile_context>

<pallas_src>
import math

import jax
import jax.numpy as jnp
from jax.experimental import pallas as pl
from jax.experimental.pallas import tpu as pltpu

# ---------------- configuration (small, consistent with the module) ----------------
IN_DIM = 8
N_HID = 32
NUM_NODE_TYPES = 3
N_ADJS = 4
N_CLASSES = 5
N_STEPS = [2, 3]
RATIO = 1.0
CSTR = [0, 2]
K = 1                  # k=1 => Op deterministically uses all candidate adjacencies
ATTN_DIM = 16
N_NODES = 16
LN_EPS = 1e-5


# ---------------------------- static DAG plan ----------------------------
# LINKS[l]      : tuple of candidate adjacency indices for DAG link l (global id)
# LINK_SCALE[l] : 1.0 for seq links, RATIO for res links (folded into coefficients)
# CELL_PLANS[c] : {"steps": [((link_id, state_idx), ...), ...],  # builds states 1..n_step-1
#                  "final": ((link_id, state_idx), ...)}         # builds the cell output
def _build_plans():
    links, link_scale, cell_plans = [], [], []
    for n_step in N_STEPS:
        seq_ids = []
        for _ in range(n_step - 1):
            seq_ids.append(len(links))
            links.append(tuple(range(N_ADJS - 1)))            # adjs[:-1]
            link_scale.append(1.0)
        ks = (n_step - 1) * (n_step - 2) // 2
        res_ids = []
        for _ in range(ks):
            res_ids.append(len(links))
            links.append(tuple(range(N_ADJS)))                # all adjs
            link_scale.append(RATIO)
        last_seq_id = len(links)
        links.append(tuple(CSTR))                             # adjs[cstr]
        link_scale.append(1.0)
        last_res_ids = []
        for _ in range(n_step - 1):
            last_res_ids.append(len(links))
            links.append(tuple(CSTR) + (N_ADJS - 1,))         # adjs[cstr] + adjs[-1]
            link_scale.append(RATIO)

        steps = []
        offset = 0
        for i in range(n_step - 1):
            terms = [(seq_ids[i], i)]                         # seq op on states[i]
            for j in range(i):                                # res ops on states[j], j<i
                terms.append((res_ids[offset + j], j))
            offset += i
            steps.append(tuple(terms))
        final_terms = [(last_seq_id, n_step - 1)]
        for i in range(n_step - 1):
            final_terms.append((last_res_ids[i], i))
        cell_plans.append({"steps": tuple(steps), "final": tuple(final_terms)})
    return tuple(links), tuple(link_scale), tuple(cell_plans)


LINKS, LINK_SCALE, CELL_PLANS = _build_plans()
N_LINKS = len(LINKS)
N_CELLS = len(N_STEPS)

# -------- packed-parameter layout (row offsets into the (104,128)/(8,128) buffers) --------
ROW_WT = 0                      # (IN_DIM, 3*N_HID)  node-type input projections
ROW_WAFF = ROW_WT + IN_DIM      # (N_HID, 2*N_HID)   per-cell affine projections
ROW_W1 = ROW_WAFF + N_HID       # (N_HID, ATTN_DIM)  attention fc1
ROW_WC = ROW_W1 + N_HID         # (N_HID, N_CLASSES) classifier
WPACK_ROWS = ROW_WC + N_HID     # = 104
LANES = 128

BROW_BT, BROW_BAFF, BROW_B1, BROW_W2, BROW_B2, BROW_BC = 0, 1, 2, 3, 4, 5
BPACK_ROWS = 8


# ---------------------------- fused Pallas kernel ----------------------------
def _model_kernel(feats_ref, types_ref, adjs_ref, c_ref, wpack_ref, bpack_ref, out_ref):
    f32 = jnp.float32
    n = feats_ref.shape[0]

    feats = feats_ref[...]                              # (N, IN_DIM)
    types = types_ref[...]                              # (N, 1) int32
    adjs = adjs_ref[...]                                # (N_ADJS, N, N)
    bpack = bpack_ref[...]                              # (8, 128)

    # ---- node-type input projection: ONE dot against [W0|W1|W2], mask-select chunks ----
    w_types = wpack_ref[ROW_WT:ROW_WT + IN_DIM, 0:NUM_NODE_TYPES * N_HID]      # (8, 96)
    b_types = bpack[BROW_BT:BROW_BT + 1, 0:NUM_NODE_TYPES * N_HID]             # (1, 96)
    proj_all = jnp.dot(feats, w_types, preferred_element_type=f32) + b_types   # (N, 96)
    hid = jnp.zeros((n, N_HID), f32)
    for t in range(NUM_NODE_TYPES):
        mask = (types == t).astype(f32)                 # (N, 1) — node types partition nodes
        hid = hid + mask * proj_all[:, t * N_HID:(t + 1) * N_HID]

    # ---- both per-cell affine projections: ONE dot against [Waff0|Waff1] ----
    w_aff = wpack_ref[ROW_WAFF:ROW_WAFF + N_HID, 0:N_CELLS * N_HID]            # (32, 64)
    b_aff = bpack[BROW_BAFF:BROW_BAFF + 1, 0:N_CELLS * N_HID]                  # (1, 64)
    x_aff = jnp.dot(hid, w_aff, preferred_element_type=f32) + b_aff            # (N, 64)

    # ---- weighted adjacency for one DAG link (coeffs hold softmax/num_op and ratio) ----
    def link_adj(lid):
        cand = LINKS[lid]
        base = lid * N_ADJS
        a = c_ref[base + cand[0]] * adjs[cand[0]]
        for p in cand[1:]:
            a = a + c_ref[base + p] * adjs[p]
        return a                                        # (N, N)

    # ---- one DAG node = ONE MXU dot: [A0 | A1 | ...] @ [s0; s1; ...] ----
    def dag_node(terms, states):
        if len(terms) == 1:
            lid, sid = terms[0]
            return jnp.dot(link_adj(lid), states[sid], preferred_element_type=f32)
        lhs = jnp.concatenate([link_adj(lid) for lid, _ in terms], axis=1)     # (N, N*T)
        rhs = jnp.concatenate([states[sid] for _, sid in terms], axis=0)       # (N*T, HID)
        return jnp.dot(lhs, rhs, preferred_element_type=f32)

    inv_sqrt2 = 1.0 / math.sqrt(2.0)
    cell_outs = []
    for ci, plan in enumerate(CELL_PLANS):
        states = [x_aff[:, ci * N_HID:(ci + 1) * N_HID]]
        for terms in plan["steps"]:
            states.append(dag_node(terms, states))      # edge == 1
        out = dag_node(plan["final"], states)
        # LayerNorm (no affine, eps=1e-5) + exact GELU
        mean = jnp.mean(out, axis=-1, keepdims=True)
        cent = out - mean
        var = jnp.mean(cent * cent, axis=-1, keepdims=True)
        y = cent * jax.lax.rsqrt(var + LN_EPS)
        y = 0.5 * y * (1.0 + jax.lax.erf(y * inv_sqrt2))
        cell_outs.append(y)

    # ---- attention over metapaths: batched fc1 dot, fc2 as VPU multiply + lane reduce ----
    w1 = wpack_ref[ROW_W1:ROW_W1 + N_HID, 0:ATTN_DIM]                          # (32, 16)
    b1 = bpack[BROW_B1:BROW_B1 + 1, 0:ATTN_DIM]                                # (1, 16)
    w2 = bpack[BROW_W2:BROW_W2 + 1, 0:ATTN_DIM]                                # (1, 16)
    b2 = bpack[BROW_B2:BROW_B2 + 1, 0:1]                                       # (1, 1)
    ystack = jnp.concatenate(cell_outs, axis=0)                                # (2N, HID)
    a1 = jnp.tanh(jnp.dot(ystack, w1, preferred_element_type=f32) + b1)        # (2N, 16)
    logits = jnp.sum(a1 * w2, axis=-1, keepdims=True) + b2                     # (2N, 1)

    l0 = logits[0:n]
    l1 = logits[n:2 * n]
    m = jnp.maximum(l0, l1)
    e0 = jnp.exp(l0 - m)
    e1 = jnp.exp(l1 - m)
    mix = (e0 * cell_outs[0] + e1 * cell_outs[1]) / (e0 + e1)

    # ---- classifier ----
    wc = wpack_ref[ROW_WC:ROW_WC + N_HID, 0:N_CLASSES]                         # (32, 5)
    bc = bpack[BROW_BC:BROW_BC + 1, 0:N_CLASSES]                               # (1, 5)
    out_ref[...] = jnp.dot(mix, wc, preferred_element_type=f32) + bc


# ---------------------------- parameter init ----------------------------
def init_linear(key, in_dim, out_dim):
    k1, k2 = jax.random.split(key)
    bound = 1.0 / math.sqrt(in_dim)
    w = jax.random.uniform(k1, (in_dim, out_dim), jnp.float32, -bound, bound)
    b = jax.random.uniform(k2, (out_dim,), jnp.float32, -bound, bound)
    return w, b


def init_params(key):
    keys = iter(jax.random.split(key, 64))
    p = {}
    p["ws"] = [init_linear(next(keys), IN_DIM, N_HID) for _ in range(NUM_NODE_TYPES)]
    p["metas"] = [{"affine": init_linear(next(keys), N_HID, N_HID)} for _ in N_STEPS]
    p["as_seq"], p["as_last_seq"], p["as_res"], p["as_last_res"] = [], [], [], []
    for n_step in N_STEPS:
        p["as_seq"].append(
            0.001 * jax.random.normal(next(keys), (n_step - 1, N_ADJS - 1), jnp.float32)
            if n_step > 1 else None)
        p["as_last_seq"].append(
            0.001 * jax.random.normal(next(keys), (len(CSTR),), jnp.float32))
        ks = (n_step - 1) * (n_step - 2) // 2
        p["as_res"].append(
            0.001 * jax.random.normal(next(keys), (ks, N_ADJS), jnp.float32)
            if ks > 0 else None)
        p["as_last_res"].append(
            0.001 * jax.random.normal(next(keys), (n_step - 1, len(CSTR) + 1), jnp.float32)
            if n_step > 1 else None)
    p["attn_fc1"] = init_linear(next(keys), N_HID, ATTN_DIM)
    p["attn_fc2"] = init_linear(next(keys), ATTN_DIM, 1)
    p["classifier"] = init_linear(next(keys), N_HID, N_CLASSES)
    return p


# ---------------------------- parameter packing (run once, NOT per forward) ----------------------------
def _make_coeffs(params):
    """Flat (N_LINKS * N_ADJS,) coefficient vector: softmax(arch)*ratio/num_op scattered
    into the candidate adjacency columns, row-major by global link id."""
    rows = []
    li = 0
    for ci, n_step in enumerate(N_STEPS):
        w_seq = None if params["as_seq"][ci] is None else jax.nn.softmax(params["as_seq"][ci], axis=-1)
        w_res = None if params["as_res"][ci] is None else jax.nn.softmax(params["as_res"][ci], axis=-1)
        w_lseq = jax.nn.softmax(params["as_last_seq"][ci], axis=-1)
        w_lres = None if params["as_last_res"][ci] is None else jax.nn.softmax(params["as_last_res"][ci], axis=-1)

        per_link = [w_seq[i] for i in range(n_step - 1)]
        ks = (n_step - 1) * (n_step - 2) // 2
        per_link += [w_res[r] for r in range(ks)]
        per_link.append(w_lseq)
        per_link += [w_lres[i] for i in range(n_step - 1)]

        for wv in per_link:
            cand = LINKS[li]
            scale = LINK_SCALE[li] / float(len(cand))
            row = jnp.zeros((N_ADJS,), jnp.float32)
            row = row.at[jnp.array(cand)].set(wv * scale)
            rows.append(row)
            li += 1
    assert li == N_LINKS
    return jnp.concatenate(rows, axis=0)


def prepare_packed(params):
    """Pack all weights/biases into two dense f32 VMEM buffers + one SMEM coeff vector.
    Done once when params change; keeps the per-forward path free of tiny XLA ops."""
    coeffs = _make_coeffs(params)                                              # (N_LINKS*N_ADJS,)

    wt = jnp.concatenate([w for (w, _) in params["ws"]], axis=1)               # (8, 96)
    bt = jnp.concatenate([b for (_, b) in params["ws"]], axis=0)               # (96,)
    waff = jnp.concatenate([m["affine"][0] for m in params["metas"]], axis=1)  # (32, 64)
    baff = jnp.concatenate([m["affine"][1] for m in params["metas"]], axis=0)  # (64,)
    w1, b1 = params["attn_fc1"]                                                # (32,16), (16,)
    w2, b2 = params["attn_fc2"]                                                # (16,1), (1,)
    wc, bc = params["classifier"]                                              # (32,5), (5,)

    def padw(w):
        return jnp.pad(w, ((0, 0), (0, LANES - w.shape[1])))

    wpack = jnp.concatenate([padw(wt), padw(waff), padw(w1), padw(wc)], axis=0)
    assert wpack.shape == (WPACK_ROWS, LANES)

    def padrow(v):
        v = jnp.asarray(v, jnp.float32).reshape(-1)
        return jnp.pad(v, (0, LANES - v.shape[0]))[None, :]

    bpack = jnp.concatenate(
        [padrow(bt), padrow(baff), padrow(b1), padrow(w2[:, 0]), padrow(b2), padrow(bc),
         jnp.zeros((BPACK_ROWS - 6, LANES), jnp.float32)], axis=0)
    assert bpack.shape == (BPACK_ROWS, LANES)

    return {"coeffs": coeffs, "wpack": wpack, "bpack": bpack}


# ---------------------------- per-call forward (jitted, thin) ----------------------------
@jax.jit
def model_forward(packed, node_feats, node_types, adjs):
    n = node_feats.shape[0]
    vmem = lambda: pl.BlockSpec(memory_space=pltpu.MemorySpace.VMEM)
    smem = pl.BlockSpec(memory_space=pltpu.MemorySpace.SMEM)

    # TODO(synk): for batched-graph workloads add a leading "parallel" grid axis over
    # graphs (uses both TensorCores on v7x and fills more MXU rows); single graph here.
    return pl.pallas_call(
        _model_kernel,
        out_shape=jax.ShapeDtypeStruct((n, N_CLASSES), jnp.float32),
        in_specs=[vmem(), vmem(), vmem(), smem, vmem(), vmem()],
        out_specs=vmem(),
    )(node_feats.astype(jnp.float32),
      node_types.astype(jnp.int32).reshape(n, 1),
      adjs.astype(jnp.float32),
      packed["coeffs"],
      packed["wpack"],
      packed["bpack"])


# ---------------------------- pure-JAX reference (correctness check) ----------------------------
def _reference_forward(params, node_feats, node_types, adjs):
    def linear(x, wb):
        w, b = wb
        return x @ w + b

    def op_all(x, adjs_sub, w):
        num = adjs_sub.shape[0]
        acc = jnp.zeros((x.shape[0], x.shape[1]), jnp.float32)
        for i in range(num):
            acc = acc + w[i] * (adjs_sub[i] @ x)
        return acc / num

    n = node_feats.shape[0]
    hid = jnp.zeros((n, N_HID), jnp.float32)
    for i in range(NUM_NODE_TYPES):
        proj = linear(node_feats, params["ws"][i])
        hid = jnp.where((node_types == i)[:, None], proj, hid)

    temps, attns = [], []
    for ci, n_step in enumerate(N_STEPS):
        ws_seq0 = None if params["as_seq"][ci] is None else jax.nn.softmax(params["as_seq"][ci], axis=-1)
        ws_seq1 = jax.nn.softmax(params["as_last_seq"][ci], axis=-1)
        ws_res0 = None if params["as_res"][ci] is None else jax.nn.softmax(params["as_res"][ci], axis=-1)
        ws_res1 = None if params["as_last_res"][ci] is None else jax.nn.softmax(params["as_last_res"][ci], axis=-1)

        x = linear(hid, params["metas"][ci]["affine"])
        states = [x]
        offset = 0
        for i in range(n_step - 1):
            seqi = op_all(states[i], adjs[:-1], ws_seq0[i])
            resi = jnp.zeros_like(seqi)
            for j in range(i):
                resi = resi + op_all(states[j], adjs, ws_res0[offset + j])
            offset += i
            states.append(seqi + RATIO * resi)
        adjs_cstr = adjs[jnp.array(CSTR)]
        out_seq = op_all(states[-1], adjs_cstr, ws_seq1)
        adjs_cstr_last = jnp.concatenate([adjs_cstr, adjs[-1:]], axis=0)
        out_res = jnp.zeros_like(out_seq)
        for i in range(n_step - 1):
            out_res = out_res + op_all(states[i], adjs_cstr_last, ws_res1[i])
        out = out_seq + RATIO * out_res
        mean = jnp.mean(out, axis=-1, keepdims=True)
        var = jnp.mean((out - mean) ** 2, axis=-1, keepdims=True)
        y = (out - mean) / jnp.sqrt(var + LN_EPS)
        y = 0.5 * y * (1.0 + jax.lax.erf(y / jnp.sqrt(2.0)))
        temps.append(y)
        a1 = jnp.tanh(linear(y, params["attn_fc1"]))
        attns.append(linear(a1, params["attn_fc2"]))

    hids = jnp.stack(temps, axis=1)
    attn = jax.nn.softmax(jnp.concatenate(attns, axis=-1), axis=-1)
    out = jnp.sum(attn[..., None] * hids, axis=1)
    return linear(out, params["classifier"])


# ---------------------------- main ----------------------------
if __name__ == "__main__":
    key = jax.random.PRNGKey(0)
    kp, kf, kt, ka = jax.random.split(key, 4)
    params = init_params(kp)

    node_feats = jax.random.normal(kf, (N_NODES, IN_DIM), jnp.float32)
    node_types = jax.random.randint(kt, (N_NODES,), 0, NUM_NODE_TYPES)
    adjs = jax.random.uniform(ka, (N_ADJS, N_NODES, N_NODES), jnp.float32)
    adjs = adjs / jnp.sum(adjs, axis=-1, keepdims=True)   # row-normalized dense adjacencies

    packed = prepare_packed(params)                       # once per param update, not per call
    logits = model_forward(packed, node_feats, node_types, adjs)
    jax.block_until_ready(logits)
    assert logits.shape == (N_NODES, N_CLASSES), logits.shape

    ref = _reference_forward(params, node_feats, node_types, adjs)
    err = float(jnp.max(jnp.abs(logits - ref)))
    assert err < 1e-3, f"max abs diff vs reference = {err}"

    print("KERNEL_OK")
</pallas_src>

<mosaic_0001>
module attributes {stable_mosaic.version = 11 : i64} {
  func.func @_model_kernel(%arg0: memref<16x8xf32, #tpu.memory_space<vmem>>, %arg1: memref<16x1xi32, #tpu.memory_space<vmem>>, %arg2: memref<4x16x16xf32, #tpu.memory_space<vmem>>, %arg3: memref<36xf32, #tpu.memory_space<smem>>, %arg4: memref<104x128xf32, #tpu.memory_space<vmem>>, %arg5: memref<8x128xf32, #tpu.memory_space<vmem>>, %arg6: memref<16x5xf32, #tpu.memory_space<vmem>>) attributes {dimension_semantics = [], scalar_prefetch = 0 : i64, scratch_operands = 0 : i64, tpu.core_type = #tpu.core_type<tc>} {
    %c0 = arith.constant 0 : index
    %c0_0 = arith.constant 0 : index
    %0 = vector.load %arg0[%c0, %c0_0] : memref<16x8xf32, #tpu.memory_space<vmem>>, vector<16x8xf32>
    %c0_1 = arith.constant 0 : index
    %c0_2 = arith.constant 0 : index
    %1 = vector.load %arg1[%c0_1, %c0_2] : memref<16x1xi32, #tpu.memory_space<vmem>>, vector<16x1xi32>
    %c0_3 = arith.constant 0 : index
    %c0_4 = arith.constant 0 : index
    %c0_5 = arith.constant 0 : index
    %2 = vector.load %arg2[%c0_3, %c0_4, %c0_5] : memref<4x16x16xf32, #tpu.memory_space<vmem>>, vector<4x16x16xf32>
    %c0_6 = arith.constant 0 : index
    %c0_7 = arith.constant 0 : index
    %3 = vector.load %arg5[%c0_6, %c0_7] : memref<8x128xf32, #tpu.memory_space<vmem>>, vector<8x128xf32>
    %c0_8 = arith.constant 0 : index
    %c0_9 = arith.constant 0 : index
    %4 = vector.load %arg4[%c0_8, %c0_9] : memref<104x128xf32, #tpu.memory_space<vmem>>, vector<8x96xf32>
    %5 = vector.extract_strided_slice %3 {offsets = [0, 0], sizes = [1, 96], strides = [1, 1]} : vector<8x128xf32> to vector<1x96xf32>
    %cst = arith.constant dense<0.000000e+00> : vector<16x96xf32>
    %6 = tpu.matmul %0, %4, %cst {dimension_numbers = #tpu.dot_dimension_numbers<[1], [0], [0], [1], [0, 0, 1, 1], [], []>} : vector<16x8xf32>, vector<8x96xf32>, vector<16x96xf32> -> vector<16x96xf32>
    %7 = vector.broadcast %5 : vector<1x96xf32> to vector<16x96xf32>
    %8 = arith.addf %6, %7 : vector<16x96xf32>
    %cst_10 = arith.constant 0.000000e+00 : f32
    %9 = vector.broadcast %cst_10 : f32 to vector<16x32xf32>
    %c0_i32 = arith.constant 0 : i32
    %10 = vector.broadcast %c0_i32 : i32 to vector<16x1xi32>
    %11 = arith.cmpi eq, %1, %10 : vector<16x1xi32>
    %12 = arith.extui %11 : vector<16x1xi1> to vector<16x1xi32>
    %13 = arith.sitofp %12 : vector<16x1xi32> to vector<16x1xf32>
    %14 = vector.extract_strided_slice %8 {offsets = [0, 0], sizes = [16, 32], strides = [1, 1]} : vector<16x96xf32> to vector<16x32xf32>
    %15 = vector.broadcast %13 : vector<16x1xf32> to vector<16x32xf32>
    %16 = arith.mulf %15, %14 : vector<16x32xf32>
    %17 = arith.addf %9, %16 : vector<16x32xf32>
    %c1_i32 = arith.constant 1 : i32
    %18 = vector.broadcast %c1_i32 : i32 to vector<16x1xi32>
    %19 = arith.cmpi eq, %1, %18 : vector<16x1xi32>
    %20 = arith.extui %19 : vector<16x1xi1> to vector<16x1xi32>
    %21 = arith.sitofp %20 : vector<16x1xi32> to vector<16x1xf32>
    %22 = vector.extract_strided_slice %8 {offsets = [0, 32], sizes = [16, 32], strides = [1, 1]} : vector<16x96xf32> to vector<16x32xf32>
    %23 = vector.broadcast %21 : vector<16x1xf32> to vector<16x32xf32>
    %24 = arith.mulf %23, %22 : vector<16x32xf32>
    %25 = arith.addf %17, %24 : vector<16x32xf32>
    %c2_i32 = arith.constant 2 : i32
    %26 = vector.broadcast %c2_i32 : i32 to vector<16x1xi32>
    %27 = arith.cmpi eq, %1, %26 : vector<16x1xi32>
    %28 = arith.extui %27 : vector<16x1xi1> to vector<16x1xi32>
    %29 = arith.sitofp %28 : vector<16x1xi32> to vector<16x1xf32>
    %30 = vector.extract_strided_slice %8 {offsets = [0, 64], sizes = [16, 32], strides = [1, 1]} : vector<16x96xf32> to vector<16x32xf32>
    %31 = vector.broadcast %29 : vector<16x1xf32> to vector<16x32xf32>
    %32 = arith.mulf %31, %30 : vector<16x32xf32>
    %33 = arith.addf %25, %32 : vector<16x32xf32>
    %c8 = arith.constant 8 : index
    %c0_11 = arith.constant 0 : index
    %34 = vector.load %arg4[%c8, %c0_11] : memref<104x128xf32, #tpu.memory_space<vmem>>, vector<32x64xf32>
    %35 = vector.extract_strided_slice %3 {offsets = [1, 0], sizes = [1, 64], strides = [1, 1]} : vector<8x128xf32> to vector<1x64xf32>
    %cst_12 = arith.constant dense<0.000000e+00> : vector<16x64xf32>
    %36 = tpu.matmul %33, %34, %cst_12 {dimension_numbers = #tpu.dot_dimension_numbers<[1], [0], [0], [1], [0, 0, 1, 1], [], []>} : vector<16x32xf32>, vector<32x64xf32>, vector<16x64xf32> -> vector<16x64xf32>
    %37 = vector.broadcast %35 : vector<1x64xf32> to vector<16x64xf32>
    %38 = arith.addf %36, %37 : vector<16x64xf32>
    %39 = vector.extract_strided_slice %38 {offsets = [0, 0], sizes = [16, 32], strides = [1, 1]} : vector<16x64xf32> to vector<16x32xf32>
    %c0_13 = arith.constant 0 : index
    %40 = memref.load %arg3[%c0_13] : memref<36xf32, #tpu.memory_space<smem>>
    %41 = vector.extract_strided_slice %2 {offsets = [0, 0, 0], sizes = [1, 16, 16], strides = [1, 1, 1]} : vector<4x16x16xf32> to vector<1x16x16xf32>
    %42 = vector.shape_cast %41 : vector<1x16x16xf32> to vector<16x16xf32>
    %43 = vector.broadcast %40 : f32 to vector<16x16xf32>
    %44 = arith.mulf %43, %42 : vector<16x16xf32>
    %c1 = arith.constant 1 : index
    %45 = memref.load %arg3[%c1] : memref<36xf32, #tpu.memory_space<smem>>
    %46 = vector.extract_strided_slice %2 {offsets = [1, 0, 0], sizes = [1, 16, 16], strides = [1, 1, 1]} : vector<4x16x16xf32> to vector<1x16x16xf32>
    %47 = vector.shape_cast %46 : vector<1x16x16xf32> to vector<16x16xf32>
    %48 = vector.broadcast %45 : f32 to vector<16x16xf32>
    %49 = arith.mulf %48, %47 : vector<16x16xf32>
    %50 = arith.addf %44, %49 : vector<16x16xf32>
    %c2 = arith.constant 2 : index
    %51 = memref.load %arg3[%c2] : memref<36xf32, #tpu.memory_space<smem>>
    %52 = vector.extract_strided_slice %2 {offsets = [2, 0, 0], sizes = [1, 16, 16], strides = [1, 1, 1]} : vector<4x16x16xf32> to vector<1x16x16xf32>
    %53 = vector.shape_cast %52 : vector<1x16x16xf32> to vector<16x16xf32>
    %54 = vector.broadcast %51 : f32 to vector<16x16xf32>
    %55 = arith.mulf %54, %53 : vector<16x16xf32>
    %56 = arith.addf %50, %55 : vector<16x16xf32>
    %cst_14 = arith.constant dense<0.000000e+00> : vector<16x32xf32>
    %57 = tpu.matmul %56, %39, %cst_14 {dimension_numbers = #tpu.dot_dimension_numbers<[1], [0], [0], [1], [0, 0, 1, 1], [], []>} : vector<16x16xf32>, vector<16x32xf32>, vector<16x32xf32> -> vector<16x32xf32>
    %c4 = arith.constant 4 : index
    %58 = memref.load %arg3[%c4] : memref<36xf32, #tpu.memory_space<smem>>
    %59 = vector.extract_strided_slice %2 {offsets = [0, 0, 0], sizes = [1, 16, 16], strides = [1, 1, 1]} : vector<4x16x16xf32> to vector<1x16x16xf32>
    %60 = vector.shape_cast %59 : vector<1x16x16xf32> to vector<16x16xf32>
    %61 = vector.broadcast %58 : f32 to vector<16x16xf32>
    %62 = arith.mulf %61, %60 : vector<16x16xf32>
    %c6 = arith.constant 6 : index
    %63 = memref.load %arg3[%c6] : memref<36xf32, #tpu.memory_space<smem>>
    %64 = vector.extract_strided_slice %2 {offsets = [2, 0, 0], sizes = [1, 16, 16], strides = [1, 1, 1]} : vector<4x16x16xf32> to vector<1x16x16xf32>
    %65 = vector.shape_cast %64 : vector<1x16x16xf32> to vector<16x16xf32>
    %66 = vector.broadcast %63 : f32 to vector<16x16xf32>
    %67 = arith.mulf %66, %65 : vector<16x16xf32>
    %68 = arith.addf %62, %67 : vector<16x16xf32>
    %c8_15 = arith.constant 8 : index
    %69 = memref.load %arg3[%c8_15] : memref<36xf32, #tpu.memory_space<smem>>
    %70 = vector.extract_strided_slice %2 {offsets = [0, 0, 0], sizes = [1, 16, 16], strides = [1, 1, 1]} : vector<4x16x16xf32> to vector<1x16x16xf32>
    %71 = vector.shape_cast %70 : vector<1x16x16xf32> to vector<16x16xf32>
    %72 = vector.broadcast %69 : f32 to vector<16x16xf32>
    %73 = arith.mulf %72, %71 : vector<16x16xf32>
    %c10 = arith.constant 10 : index
    %74 = memref.load %arg3[%c10] : memref<36xf32, #tpu.memory_space<smem>>
    %75 = vector.extract_strided_slice %2 {offsets = [2, 0, 0], sizes = [1, 16, 16], strides = [1, 1, 1]} : vector<4x16x16xf32> to vector<1x16x16xf32>
    %76 = vector.shape_cast %75 : vector<1x16x16xf32> to vector<16x16xf32>
    %77 = vector.broadcast %74 : f32 to vector<16x16xf32>
    %78 = arith.mulf %77, %76 : vector<16x16xf32>
    %79 = arith.addf %73, %78 : vector<16x16xf32>
    %c11 = arith.constant 11 : index
    %80 = memref.load %arg3[%c11] : memref<36xf32, #tpu.memory_space<smem>>
    %81 = vector.extract_strided_slice %2 {offsets = [3, 0, 0], sizes = [1, 16, 16], strides = [1, 1, 1]} : vector<4x16x16xf32> to vector<1x16x16xf32>
    %82 = vector.shape_cast %81 : vector<1x16x16xf32> to vector<16x16xf32>
    %83 = vector.broadcast %80 : f32 to vector<16x16xf32>
    %84 = arith.mulf %83, %82 : vector<16x16xf32>
    %85 = arith.addf %79, %84 : vector<16x16xf32>
    %86 = tpu.concatenate %68, %85 in 1 : vector<16x16xf32>, vector<16x16xf32> -> vector<16x32xf32>
    %87 = tpu.concatenate %57, %39 in 0 : vector<16x32xf32>, vector<16x32xf32> -> vector<32x32xf32>
    %cst_16 = arith.constant dense<0.000000e+00> : vector<16x32xf32>
    %88 = tpu.matmul %86, %87, %cst_16 {dimension_numbers = #tpu.dot_dimension_numbers<[1], [0], [0], [1], [0, 0, 1, 1], [], []>} : vector<16x32xf32>, vector<32x32xf32>, vector<16x32xf32> -> vector<16x32xf32>
    %cst_17 = arith.constant dense<0.000000e+00> : vector<16xf32>
    %89 = vector.multi_reduction <add>, %88, %cst_17 [1] : vector<16x32xf32> to vector<16xf32>
    %90 = vector.shape_cast %89 : vector<16xf32> to vector<16x1xf32>
    %cst_18 = arith.constant 3.200000e+01 : f32
    %91 = vector.broadcast %cst_18 : f32 to vector<16x1xf32>
    %92 = arith.divf %90, %91 : vector<16x1xf32>
    %93 = vector.broadcast %92 : vector<16x1xf32> to vector<16x32xf32>
    %94 = arith.subf %88, %93 : vector<16x32xf32>
    %95 = arith.mulf %94, %94 : vector<16x32xf32>
    %cst_19 = arith.constant dense<0.000000e+00> : vector<16xf32>
    %96 = vector.multi_reduction <add>, %95, %cst_19 [1] : vector<16x32xf32> to vector<16xf32>
    %97 = vector.shape_cast %96 : vector<16xf32> to vector<16x1xf32>
    %cst_20 = arith.constant 3.200000e+01 : f32
    %98 = vector.broadcast %cst_20 : f32 to vector<16x1xf32>
    %99 = arith.divf %97, %98 : vector<16x1xf32>
    %cst_21 = arith.constant 9.99999974E-6 : f32
    %100 = vector.broadcast %cst_21 : f32 to vector<16x1xf32>
    %101 = arith.addf %99, %100 : vector<16x1xf32>
    %102 = math.rsqrt %101 : vector<16x1xf32>
    %103 = vector.broadcast %102 : vector<16x1xf32> to vector<16x32xf32>
    %104 = arith.mulf %94, %103 : vector<16x32xf32>
    %cst_22 = arith.constant 5.000000e-01 : f32
    %105 = vector.broadcast %cst_22 : f32 to vector<16x32xf32>
    %106 = arith.mulf %105, %104 : vector<16x32xf32>
    %cst_23 = arith.constant 0.707106769 : f32
    %107 = vector.broadcast %cst_23 : f32 to vector<16x32xf32>
    %108 = arith.mulf %104, %107 : vector<16x32xf32>
    %109 = math.erf %108 : vector<16x32xf32>
    %cst_24 = arith.constant 1.000000e+00 : f32
    %110 = vector.broadcast %cst_24 : f32 to vector<16x32xf32>
    %111 = arith.addf %110, %109 : vector<16x32xf32>
    %112 = arith.mulf %106, %111 : vector<16x32xf32>
    %113 = vector.extract_strided_slice %38 {offsets = [0, 32], sizes = [16, 32], strides = [1, 1]} : vector<16x64xf32> to vector<16x32xf32>
    %c12 = arith.constant 12 : index
    %114 = memref.load %arg3[%c12] : memref<36xf32, #tpu.memory_space<smem>>
    %115 = vector.extract_strided_slice %2 {offsets = [0, 0, 0], sizes = [1, 16, 16], strides = [1, 1, 1]} : vector<4x16x16xf32> to vector<1x16x16xf32>
    %116 = vector.shape_cast %115 : vector<1x16x16xf32> to vector<16x16xf32>
    %117 = vector.broadcast %114 : f32 to vector<16x16xf32>
    %118 = arith.mulf %117, %116 : vector<16x16xf32>
    %c13 = arith.constant 13 : index
    %119 = memref.load %arg3[%c13] : memref<36xf32, #tpu.memory_space<smem>>
    %120 = vector.extract_strided_slice %2 {offsets = [1, 0, 0], sizes = [1, 16, 16], strides = [1, 1, 1]} : vector<4x16x16xf32> to vector<1x16x16xf32>
    %121 = vector.shape_cast %120 : vector<1x16x16xf32> to vector<16x16xf32>
    %122 = vector.broadcast %119 : f32 to vector<16x16xf32>
    %123 = arith.mulf %122, %121 : vector<16x16xf32>
    %124 = arith.addf %118, %123 : vector<16x16xf32>
    %c14 = arith.constant 14 : index
    %125 = memref.load %arg3[%c14] : memref<36xf32, #tpu.memory_space<smem>>
    %126 = vector.extract_strided_slice %2 {offsets = [2, 0, 0], sizes = [1, 16, 16], strides = [1, 1, 1]} : vector<4x16x16xf32> to vector<1x16x16xf32>
    %127 = vector.shape_cast %126 : vector<1x16x16xf32> to vector<16x16xf32>
    %128 = vector.broadcast %125 : f32 to vector<16x16xf32>
    %129 = arith.mulf %128, %127 : vector<16x16xf32>
    %130 = arith.addf %124, %129 : vector<16x16xf32>
    %cst_25 = arith.constant dense<0.000000e+00> : vector<16x32xf32>
    %131 = tpu.matmul %130, %113, %cst_25 {dimension_numbers = #tpu.dot_dimension_numbers<[1], [0], [0], [1], [0, 0, 1, 1], [], []>} : vector<16x16xf32>, vector<16x32xf32>, vector<16x32xf32> -> vector<16x32xf32>
    %c16 = arith.constant 16 : index
    %132 = memref.load %arg3[%c16] : memref<36xf32, #tpu.memory_space<smem>>
    %133 = vector.extract_strided_slice %2 {offsets = [0, 0, 0], sizes = [1, 16, 16], strides = [1, 1, 1]} : vector<4x16x16xf32> to vector<1x16x16xf32>
    %134 = vector.shape_cast %133 : vector<1x16x16xf32> to vector<16x16xf32>
    %135 = vector.broadcast %132 : f32 to vector<16x16xf32>
    %136 = arith.mulf %135, %134 : vector<16x16xf32>
    %c17 = arith.constant 17 : index
    %137 = memref.load %arg3[%c17] : memref<36xf32, #tpu.memory_space<smem>>
    %138 = vector.extract_strided_slice %2 {offsets = [1, 0, 0], sizes = [1, 16, 16], strides = [1, 1, 1]} : vector<4x16x16xf32> to vector<1x16x16xf32>
    %139 = vector.shape_cast %138 : vector<1x16x16xf32> to vector<16x16xf32>
    %140 = vector.broadcast %137 : f32 to vector<16x16xf32>
    %141 = arith.mulf %140, %139 : vector<16x16xf32>
    %142 = arith.addf %136, %141 : vector<16x16xf32>
    %c18 = arith.constant 18 : index
    %143 = memref.load %arg3[%c18] : memref<36xf32, #tpu.memory_space<smem>>
    %144 = vector.extract_strided_slice %2 {offsets = [2, 0, 0], sizes = [1, 16, 16], strides = [1, 1, 1]} : vector<4x16x16xf32> to vector<1x16x16xf32>
    %145 = vector.shape_cast %144 : vector<1x16x16xf32> to vector<16x16xf32>
    %146 = vector.broadcast %143 : f32 to vector<16x16xf32>
    %147 = arith.mulf %146, %145 : vector<16x16xf32>
    %148 = arith.addf %142, %147 : vector<16x16xf32>
    %c20 = arith.constant 20 : index
    %149 = memref.load %arg3[%c20] : memref<36xf32, #tpu.memory_space<smem>>
    %150 = vector.extract_strided_slice %2 {offsets = [0, 0, 0], sizes = [1, 16, 16], strides = [1, 1, 1]} : vector<4x16x16xf32> to vector<1x16x16xf32>
    %151 = vector.shape_cast %150 : vector<1x16x16xf32> to vector<16x16xf32>
    %152 = vector.broadcast %149 : f32 to vector<16x16xf32>
    %153 = arith.mulf %152, %151 : vector<16x16xf32>
    %c21 = arith.constant 21 : index
    %154 = memref.load %arg3[%c21] : memref<36xf32, #tpu.memory_space<smem>>
    %155 = vector.extract_strided_slice %2 {offsets = [1, 0, 0], sizes = [1, 16, 16], strides = [1, 1, 1]} : vector<4x16x16xf32> to vector<1x16x16xf32>
    %156 = vector.shape_cast %155 : vector<1x16x16xf32> to vector<16x16xf32>
    %157 = vector.broadcast %154 : f32 to vector<16x16xf32>
    %158 = arith.mulf %157, %156 : vector<16x16xf32>
    %159 = arith.addf %153, %158 : vector<16x16xf32>
    %c22 = arith.constant 22 : index
    %160 = memref.load %arg3[%c22] : memref<36xf32, #tpu.memory_space<smem>>
    %161 = vector.extract_strided_slice %2 {offsets = [2, 0, 0], sizes = [1, 16, 16], strides = [1, 1, 1]} : vector<4x16x16xf32> to vector<1x16x16xf32>
    %162 = vector.shape_cast %161 : vector<1x16x16xf32> to vector<16x16xf32>
    %163 = vector.broadcast %160 : f32 to vector<16x16xf32>
    %164 = arith.mulf %163, %162 : vector<16x16xf32>
    %165 = arith.addf %159, %164 : vector<16x16xf32>
    %c23 = arith.constant 23 : index
    %166 = memref.load %arg3[%c23] : memref<36xf32, #tpu.memory_space<smem>>
    %167 = vector.extract_strided_slice %2 {offsets = [3, 0, 0], sizes = [1, 16, 16], strides = [1, 1, 1]} : vector<4x16x16xf32> to vector<1x16x16xf32>
    %168 = vector.shape_cast %167 : vector<1x16x16xf32> to vector<16x16xf32>
    %169 = vector.broadcast %166 : f32 to vector<16x16xf32>
    %170 = arith.mulf %169, %168 : vector<16x16xf32>
    %171 = arith.addf %165, %170 : vector<16x16xf32>
    %172 = tpu.concatenate %148, %171 in 1 : vector<16x16xf32>, vector<16x16xf32> -> vector<16x32xf32>
    %173 = tpu.concatenate %131, %113 in 0 : vector<16x32xf32>, vector<16x32xf32> -> vector<32x32xf32>
    %cst_26 = arith.constant dense<0.000000e+00> : vector<16x32xf32>
    %174 = tpu.matmul %172, %173, %cst_26 {dimension_numbers = #tpu.dot_dimension_numbers<[1], [0], [0], [1], [0, 0, 1, 1], [], []>} : vector<16x32xf32>, vector<32x32xf32>, vector<16x32xf32> -> vector<16x32xf32>
    %c24 = arith.constant 24 : index
    %175 = memref.load %arg3[%c24] : memref<36xf32, #tpu.memory_space<smem>>
    %176 = vector.extract_strided_slice %2 {offsets = [0, 0, 0], sizes = [1, 16, 16], strides = [1, 1, 1]} : vector<4x16x16xf32> to vector<1x16x16xf32>
    %177 = vector.shape_cast %176 : vector<1x16x16xf32> to vector<16x16xf32>
    %178 = vector.broadcast %175 : f32 to vector<16x16xf32>
    %179 = arith.mulf %178, %177 : vector<16x16xf32>
    %c26 = arith.constant 26 : index
    %180 = memref.load %arg3[%c26] : memref<36xf32, #tpu.memory_space<smem>>
    %181 = vector.extract_strided_slice %2 {offsets = [2, 0, 0], sizes = [1, 16, 16], strides = [1, 1, 1]} : vector<4x16x16xf32> to vector<1x16x16xf32>
    %182 = vector.shape_cast %181 : vector<1x16x16xf32> to vector<16x16xf32>
    %183 = vector.broadcast %180 : f32 to vector<16x16xf32>
    %184 = arith.mulf %183, %182 : vector<16x16xf32>
    %185 = arith.addf %179, %184 : vector<16x16xf32>
    %c28 = arith.constant 28 : index
    %186 = memref.load %arg3[%c28] : memref<36xf32, #tpu.memory_space<smem>>
    %187 = vector.extract_strided_slice %2 {offsets = [0, 0, 0], sizes = [1, 16, 16], strides = [1, 1, 1]} : vector<4x16x16xf32> to vector<1x16x16xf32>
    %188 = vector.shape_cast %187 : vector<1x16x16xf32> to vector<16x16xf32>
    %189 = vector.broadcast %186 : f32 to vector<16x16xf32>
    %190 = arith.mulf %189, %188 : vector<16x16xf32>
    %c30 = arith.constant 30 : index
    %191 = memref.load %arg3[%c30] : memref<36xf32, #tpu.memory_space<smem>>
    %192 = vector.extract_strided_slice %2 {offsets = [2, 0, 0], sizes = [1, 16, 16], strides = [1, 1, 1]} : vector<4x16x16xf32> to vector<1x16x16xf32>
    %193 = vector.shape_cast %192 : vector<1x16x16xf32> to vector<16x16xf32>
    %194 = vector.broadcast %191 : f32 to vector<16x16xf32>
    %195 = arith.mulf %194, %193 : vector<16x16xf32>
    %196 = arith.addf %190, %195 : vector<16x16xf32>
    %c31 = arith.constant 31 : index
    %197 = memref.load %arg3[%c31] : memref<36xf32, #tpu.memory_space<smem>>
    %198 = vector.extract_strided_slice %2 {offsets = [3, 0, 0], sizes = [1, 16, 16], strides = [1, 1, 1]} : vector<4x16x16xf32> to vector<1x16x16xf32>
    %199 = vector.shape_cast %198 : vector<1x16x16xf32> to vector<16x16xf32>
    %200 = vector.broadcast %197 : f32 to vector<16x16xf32>
    %201 = arith.mulf %200, %199 : vector<16x16xf32>
    %202 = arith.addf %196, %201 : vector<16x16xf32>
    %c32 = arith.constant 32 : index
    %203 = memref.load %arg3[%c32] : memref<36xf32, #tpu.memory_space<smem>>
    %204 = vector.extract_strided_slice %2 {offsets = [0, 0, 0], sizes = [1, 16, 16], strides = [1, 1, 1]} : vector<4x16x16xf32> to vector<1x16x16xf32>
    %205 = vector.shape_cast %204 : vector<1x16x16xf32> to vector<16x16xf32>
    %206 = vector.broadcast %203 : f32 to vector<16x16xf32>
    %207 = arith.mulf %206, %205 : vector<16x16xf32>
    %c34 = arith.constant 34 : index
    %208 = memref.load %arg3[%c34] : memref<36xf32, #tpu.memory_space<smem>>
    %209 = vector.extract_strided_slice %2 {offsets = [2, 0, 0], sizes = [1, 16, 16], strides = [1, 1, 1]} : vector<4x16x16xf32> to vector<1x16x16xf32>
    %210 = vector.shape_cast %209 : vector<1x16x16xf32> to vector<16x16xf32>
    %211 = vector.broadcast %208 : f32 to vector<16x16xf32>
    %212 = arith.mulf %211, %210 : vector<16x16xf32>
    %213 = arith.addf %207, %212 : vector<16x16xf32>
    %c35 = arith.constant 35 : index
    %214 = memref.load %arg3[%c35] : memref<36xf32, #tpu.memory_space<smem>>
    %215 = vector.extract_strided_slice %2 {offsets = [3, 0, 0], sizes = [1, 16, 16], strides = [1, 1, 1]} : vector<4x16x16xf32> to vector<1x16x16xf32>
    %216 = vector.shape_cast %215 : vector<1x16x16xf32> to vector<16x16xf32>
    %217 = vector.broadcast %214 : f32 to vector<16x16xf32>
    %218 = arith.mulf %217, %216 : vector<16x16xf32>
    %219 = arith.addf %213, %218 : vector<16x16xf32>
    %220 = tpu.concatenate %185, %202, %219 in 1 : vector<16x16xf32>, vector<16x16xf32>, vector<16x16xf32> -> vector<16x48xf32>
    %221 = tpu.concatenate %174, %113, %131 in 0 : vector<16x32xf32>, vector<16x32xf32>, vector<16x32xf32> -> vector<48x32xf32>
    %cst_27 = arith.constant dense<0.000000e+00> : vector<16x32xf32>
    %222 = tpu.matmul %220, %221, %cst_27 {dimension_numbers = #tpu.dot_dimension_numbers<[1], [0], [0], [1], [0, 0, 1, 1], [], []>} : vector<16x48xf32>, vector<48x32xf32>, vector<16x32xf32> -> vector<16x32xf32>
    %cst_28 = arith.constant dense<0.000000e+00> : vector<16xf32>
    %223 = vector.multi_reduction <add>, %222, %cst_28 [1] : vector<16x32xf32> to vector<16xf32>
    %224 = vector.shape_cast %223 : vector<16xf32> to vector<16x1xf32>
    %cst_29 = arith.constant 3.200000e+01 : f32
    %225 = vector.broadcast %cst_29 : f32 to vector<16x1xf32>
    %226 = arith.divf %224, %225 : vector<16x1xf32>
    %227 = vector.broadcast %226 : vector<16x1xf32> to vector<16x32xf32>
    %228 = arith.subf %222, %227 : vector<16x32xf32>
    %229 = arith.mulf %228, %228 : vector<16x32xf32>
    %cst_30 = arith.constant dense<0.000000e+00> : vector<16xf32>
    %230 = vector.multi_reduction <add>, %229, %cst_30 [1] : vector<16x32xf32> to vector<16xf32>
    %231 = vector.shape_cast %230 : vector<16xf32> to vector<16x1xf32>
    %cst_31 = arith.constant 3.200000e+01 : f32
    %232 = vector.broadcast %cst_31 : f32 to vector<16x1xf32>
    %233 = arith.divf %231, %232 : vector<16x1xf32>
    %cst_32 = arith.constant 9.99999974E-6 : f32
    %234 = vector.broadcast %cst_32 : f32 to vector<16x1xf32>
    %235 = arith.addf %233, %234 : vector<16x1xf32>
    %236 = math.rsqrt %235 : vector<16x1xf32>
    %237 = vector.broadcast %236 : vector<16x1xf32> to vector<16x32xf32>
    %238 = arith.mulf %228, %237 : vector<16x32xf32>
    %cst_33 = arith.constant 5.000000e-01 : f32
    %239 = vector.broadcast %cst_33 : f32 to vector<16x32xf32>
    %240 = arith.mulf %239, %238 : vector<16x32xf32>
    %cst_34 = arith.constant 0.707106769 : f32
    %241 = vector.broadcast %cst_34 : f32 to vector<16x32xf32>
    %242 = arith.mulf %238, %241 : vector<16x32xf32>
    %243 = math.erf %242 : vector<16x32xf32>
    %cst_35 = arith.constant 1.000000e+00 : f32
    %244 = vector.broadcast %cst_35 : f32 to vector<16x32xf32>
    %245 = arith.addf %244, %243 : vector<16x32xf32>
    %246 = arith.mulf %240, %245 : vector<16x32xf32>
    %c40 = arith.constant 40 : index
    %c0_36 = arith.constant 0 : index
    %247 = vector.load %arg4[%c40, %c0_36] : memref<104x128xf32, #tpu.memory_space<vmem>>, vector<32x16xf32>
    %248 = vector.extract_strided_slice %3 {offsets = [2, 0], sizes = [1, 16], strides = [1, 1]} : vector<8x128xf32> to vector<1x16xf32>
    %249 = vector.extract_strided_slice %3 {offsets = [3, 0], sizes = [1, 16], strides = [1, 1]} : vector<8x128xf32> to vector<1x16xf32>
    %250 = vector.extract_strided_slice %3 {offsets = [4, 0], sizes = [1, 1], strides = [1, 1]} : vector<8x128xf32> to vector<1x1xf32>
    %251 = tpu.concatenate %112, %246 in 0 : vector<16x32xf32>, vector<16x32xf32> -> vector<32x32xf32>
    %cst_37 = arith.constant dense<0.000000e+00> : vector<32x16xf32>
    %252 = tpu.matmul %251, %247, %cst_37 {dimension_numbers = #tpu.dot_dimension_numbers<[1], [0], [0], [1], [0, 0, 1, 1], [], []>} : vector<32x32xf32>, vector<32x16xf32>, vector<32x16xf32> -> vector<32x16xf32>
    %253 = vector.broadcast %248 : vector<1x16xf32> to vector<32x16xf32>
    %254 = arith.addf %252, %253 : vector<32x16xf32>
    %255 = math.tanh %254 : vector<32x16xf32>
    %256 = vector.broadcast %249 : vector<1x16xf32> to vector<32x16xf32>
    %257 = arith.mulf %255, %256 : vector<32x16xf32>
    %cst_38 = arith.constant dense<0.000000e+00> : vector<32xf32>
    %258 = vector.multi_reduction <add>, %257, %cst_38 [1] : vector<32x16xf32> to vector<32xf32>
    %259 = vector.shape_cast %258 : vector<32xf32> to vector<32x1xf32>
    %260 = vector.broadcast %250 : vector<1x1xf32> to vector<32x1xf32>
    %261 = arith.addf %259, %260 : vector<32x1xf32>
    %262 = vector.extract_strided_slice %261 {offsets = [0, 0], sizes = [16, 1], strides = [1, 1]} : vector<32x1xf32> to vector<16x1xf32>
    %263 = vector.extract_strided_slice %261 {offsets = [16, 0], sizes = [16, 1], strides = [1, 1]} : vector<32x1xf32> to vector<16x1xf32>
    %264 = arith.maximumf %262, %263 : vector<16x1xf32>
    %265 = arith.subf %262, %264 : vector<16x1xf32>
    %266 = math.exp %265 : vector<16x1xf32>
    %267 = arith.subf %263, %264 : vector<16x1xf32>
    %268 = math.exp %267 : vector<16x1xf32>
    %269 = vector.broadcast %266 : vector<16x1xf32> to vector<16x32xf32>
    %270 = arith.mulf %269, %112 : vector<16x32xf32>
    %271 = vector.broadcast %268 : vector<16x1xf32> to vector<16x32xf32>
    %272 = arith.mulf %271, %246 : vector<16x32xf32>
    %273 = arith.addf %270, %272 : vector<16x32xf32>
    %274 = arith.addf %266, %268 : vector<16x1xf32>
    %275 = vector.broadcast %274 : vector<16x1xf32> to vector<16x32xf32>
    %276 = arith.divf %273, %275 : vector<16x32xf32>
    %c72 = arith.constant 72 : index
    %c0_39 = arith.constant 0 : index
    %277 = vector.load %arg4[%c72, %c0_39] : memref<104x128xf32, #tpu.memory_space<vmem>>, vector<32x5xf32>
    %278 = vector.extract_strided_slice %3 {offsets = [5, 0], sizes = [1, 5], strides = [1, 1]} : vector<8x128xf32> to vector<1x5xf32>
    %cst_40 = arith.constant dense<0.000000e+00> : vector<16x5xf32>
    %279 = tpu.matmul %276, %277, %cst_40 {dimension_numbers = #tpu.dot_dimension_numbers<[1], [0], [0], [1], [0, 0, 1, 1], [], []>} : vector<16x32xf32>, vector<32x5xf32>, vector<16x5xf32> -> vector<16x5xf32>
    %280 = vector.broadcast %278 : vector<1x5xf32> to vector<16x5xf32>
    %281 = arith.addf %279, %280 : vector<16x5xf32>
    %c0_41 = arith.constant 0 : index
    %c0_42 = arith.constant 0 : index
    %282 = vector.load %arg6[%c0_41, %c0_42] : memref<16x5xf32, #tpu.memory_space<vmem>>, vector<16x5xf32>
    tpu.vector_store %arg6[%c0_41, %c0_42], %281 {strides = array<i32>} : memref<16x5xf32, #tpu.memory_space<vmem>>, vector<16x5xf32>,
    return
  }
}

</mosaic_0001>

<llo_original>
// kernel: model_forward.1
$region0: #{model_forward.1}
  #allocation0 [shape = 'u32[]', space=smem, size = 0x4, offset = 0x4, fixed_abs, tag = 'smem constant byte address 0x4 - core index']
  #allocation1 [shape = 'u32[72,128]{1,0:T(1,128)}', space=vmem, size = 0x9000, scoped, tag = 'internal scratch']
  %s0 = inlined_call_operand.vmem [shape: f32[16,8], index: 0, kind: input, shape index: {}]
  %s1 = inlined_call_operand.vmem [shape: s32[16,1], index: 1, kind: input, shape index: {}]
  %s2 = inlined_call_operand.hbm [shape: f32[4,16,16], index: 2, kind: input, shape index: {}]
  %s3 = inlined_call_operand.vmem [shape: f32[36], index: 3, kind: input, shape index: {}]
  %s4 = inlined_call_operand.hbm [shape: f32[104,128], index: 4, kind: input, shape index: {}]
  %s5 = inlined_call_operand.vmem [shape: f32[8,128], index: 5, kind: input, shape index: {}]
  %s6 = inlined_call_operand.vmem [shape: f32[16,5], index: 6, kind: output, shape index: {}]
  %s7 = sld [smem:[#allocation0]]
  $region46: #{model_forward.1} parent=0
    _
  %s9 = ssub.s32 1, %s7
  %s10 = scalar_select 0, %s9, %s7
  $region1: #{model_forward.1} parent=0
    #allocation2 [shape = 'u8[32768]{0}', space=vmem, size = 0x8000, scoped, tag = 'input window, operand 2, single buffered']
    #allocation3 [shape = 's32[1]{0}', space=sflag, size = 0x4, scoped, tag = 'scoped memory for model_forward.1']
    #allocation4 [shape = 's32[1]{0}', space=sflag, size = 0x4, scoped, tag = 'scoped memory for model_forward.1']
    #allocation5 [shape = 'u8[512]{0}', space=smem, size = 0x200, scoped, tag = 'input window, operand 3, single buffered']
    #allocation6 [shape = 'u8[53248]{0}', space=vmem, size = 0xd000, scoped, tag = 'input window, operand 4, single buffered']
    #allocation7 [shape = 's32[1]{0}', space=sflag, size = 0x4, scoped, tag = 'scoped memory for model_forward.1']
    %11 = vsyncpa [#allocation3], 0
    %12 = vsyncpa [#allocation4], 0
    %13 = vsyncpa [#allocation7], 0
    // Predicated region
    $region2: #{model_forward.1} parent=1 // pred_check
      _
    $region3: #{model_forward.1} parent=1 // pred_check_branch
      %15 = sbr.rel (0) target = $region5
    $region4: #{model_forward.1} parent=1 // pred_region
      _
    $region5: #{model_forward.1} parent=1 // pred_fallthru
      _
    // Predicated region
    $region6: #{model_forward.1} parent=1 // pred_check
      _
    $region7: #{model_forward.1} parent=1 // pred_check_branch
      %17 = sbr.rel (0) target = $region9
    $region8: #{model_forward.1} parent=1 // pred_region
      _
    $region9: #{model_forward.1} parent=1 // pred_fallthru
      _
    // Predicated region
    $region10: #{model_forward.1} parent=1 // pred_check
      _
    $region11: #{model_forward.1} parent=1 // pred_check_branch
      %19 = sbr.rel (0) target = $region13
    $region12: #{model_forward.1} parent=1 // pred_region
      %21 = vsyncadd [#allocation3], 0
      %s22 = sshll.u32 %s2, 4
      %s23 = int_to_ptr.hbm [resolvable:$true] %s22
      %s24 = sshll.u32 [#allocation2], 4
      %s25 = int_to_ptr.vmem [resolvable:$true] %s24
      %30 = dma.hbm_to_vmem [thread:$0]  %s23, 1024, %s25, [#allocation3], 128, 128, 8
    $region13: #{model_forward.1} parent=1 // pred_fallthru
      _
    // Predicated region
    $region14: #{model_forward.1} parent=1 // pred_check
      _
    $region15: #{model_forward.1} parent=1 // pred_check_branch
      %32 = sbr.rel (0) target = $region17
    $region16: #{model_forward.1} parent=1 // pred_region
      %34 = vsyncadd [#allocation4], 0
      %s36 = sshll.u32 %s3, 4
      %s37 = int_to_ptr.vmem [resolvable:$true] %s36
      %39 = dma.vmem_to_smem %s37, 16, [#allocation5], [#allocation4]
    $region17: #{model_forward.1} parent=1 // pred_fallthru
      _
    // Predicated region
    $region18: #{model_forward.1} parent=1 // pred_check
      _
    $region19: #{model_forward.1} parent=1 // pred_check_branch
      %41 = sbr.rel (0) target = $region21
    $region20: #{model_forward.1} parent=1 // pred_region
      %43 = vsyncadd [#allocation7], 0
      %s44 = sshll.u32 %s4, 4
      %s45 = int_to_ptr.hbm [resolvable:$true] %s44
      %s46 = sshll.u32 [#allocation6], 4
      %s47 = int_to_ptr.vmem [resolvable:$true] %s46
      %52 = dma.hbm_to_vmem [thread:$0]  %s45, 1664, %s47, [#allocation7], 128, 128, 8
    $region21: #{model_forward.1} parent=1 // pred_fallthru
      _
    // Predicated region
    $region22: #{model_forward.1} parent=1 // pred_check
      _
    $region23: #{model_forward.1} parent=1 // pred_check_branch
      %54 = sbr.rel (0) target = $region25
    $region24: #{model_forward.1} parent=1 // pred_region
      _
    $region25: #{model_forward.1} parent=1 // pred_fallthru
      _
    // Predicated region
    $region26: #{model_forward.1} parent=1 // pred_check
      _
    $region27: #{model_forward.1} parent=1 // pred_check_branch
      %56 = sbr.rel (0) target = $region29
    $region28: #{model_forward.1} parent=1 // pred_region
      %58 = dma.done [#allocation3], 1024
    $region29: #{model_forward.1} parent=1 // pred_fallthru
      _
    // Predicated region
    $region30: #{model_forward.1} parent=1 // pred_check
      _
    $region31: #{model_forward.1} parent=1 // pred_check_branch
      %60 = sbr.rel (0) target = $region33
    $region32: #{model_forward.1} parent=1 // pred_region
      %62 = dma.done [#allocation4], 16
    $region33: #{model_forward.1} parent=1 // pred_fallthru
      _
    // Predicated region
    $region34: #{model_forward.1} parent=1 // pred_check
      _
    $region35: #{model_forward.1} parent=1 // pred_check_branch
      %64 = sbr.rel (0) target = $region37
    $region36: #{model_forward.1} parent=1 // pred_region
      %66 = dma.done [#allocation7], 1664
    $region37: #{model_forward.1} parent=1 // pred_fallthru
      _
    %67 = sfence
    %v68 = vld [vmem:[%s0] sm:$0xff]
    %v69 = vld [vmem:[%s0 + $0x8] sm:$0xff]
    %v70 = vld [vmem:[%s1] sm:$0xff]
    %v71 = vld [vmem:[%s1 + $0x8] sm:$0xff]
    %v72 = vld [vmem:[#allocation2] sm:$0xff]
    %v73 = vld [vmem:[#allocation2 + $0x8] sm:$0xff]
    %v74 = vld [vmem:[#allocation2 + $0x10] sm:$0xff]
    %v75 = vld [vmem:[#allocation2 + $0x18] sm:$0xff]
    %v76 = vld [vmem:[#allocation2 + $0x20] sm:$0xff]
    %v77 = vld [vmem:[#allocation2 + $0x28] sm:$0xff]
    %v78 = vld [vmem:[#allocation2 + $0x30] sm:$0xff]
    %v79 = vld [vmem:[#allocation2 + $0x38] sm:$0xff]
    %v80 = vld [vmem:[%s5] sm:$0xff]
    %v81 = vld [vmem:[#allocation6] sm:$0xff]
    %v82 = vperm.slane %v80, 0
    %vm83 = vcmask 64512
    %v85 = vsel %vm83, %v68, 0
    %v88 = vsel %vm83, %v69, 0
    %90 = vmatpush.msra.mxu0 0.0
    %91 = vmatpush.msra.mxu0 0.0
    %92 = vmatpush.msra.mxu0 0.0
    %93 = vmatpush.msra.mxu0 0.0
    %94 = vmatpush.msra.mxu0 0.0
    %95 = vmatpush.msra.mxu0 0.0
    %96 = vmatpush.msra.mxu0 0.0
    %97 = vmatpush.msra.mxu0 0.0
    %98 = vmatpush.msra.mxu0 0.0
    %99 = vmatpush.msra.mxu0 0.0
    %100 = vmatpush.msra.mxu0 0.0
    %101 = vmatpush.msra.mxu0 0.0
    %102 = vmatpush.msra.mxu0 0.0
    %103 = vmatpush.msra.mxu0 0.0
    %104 = vmatpush.msra.mxu0 0.0
    %105 = vmatpush.msra.mxu0 %v81
    %106 = vmatmul.f32.gmra.mxu0 %v85
    %v107 = vpop.f32.mrf.mxu0
    %v108 = vadd.f32 %v82, %v107
    %109 = vmatmul.f32.gmra.mxu0 %v88
    %v110 = vpop.f32.mrf.mxu0
    %v111 = vadd.f32 %v82, %v110
    %112 = vdwg.mxu0
    %vm113 = vcmp.eq.s32.totalorder %v70, 0
    %vm114 = vcmp.eq.s32.totalorder %v71, 0
    %v115 = vsel %vm113, 1, 0
    %v116 = vsel %vm114, 1, 0
    %v117 = vcvt.s32.f32 %v115
    %v118 = vcvt.s32.f32 %v116
    %120 = vset.pattern.permute.xlu0 0
    %121 = vperm.xlu0 %120, %v117
    %v122 = vpop.permute.xlu0 %121
    %125 = vset.pattern.permute.xlu0 0
    %126 = vperm.xlu0 %125, %v118
    %v127 = vpop.permute.xlu0 %126
    %v129 = vmul.f32 %v122, %v108
    %v130 = vmul.f32 %v127, %v111
    %v131 = vadd.f32 %v129, 0.0
    %v132 = vadd.f32 %v130, 0.0
    %vm133 = vcmp.eq.s32.totalorder %v70, 1
    %vm134 = vcmp.eq.s32.totalorder %v71, 1
    %v135 = vsel %vm133, 1, 0
    %v136 = vsel %vm134, 1, 0
    %v137 = vcvt.s32.f32 %v135
    %v138 = vcvt.s32.f32 %v136
    %140 = vset.pattern.permute.xlu0 0
    %141 = vperm.xlu0 %140, %v137
    %v142 = vpop.permute.xlu0 %141
    %145 = vset.pattern.permute.xlu0 0
    %146 = vperm.xlu0 %145, %v138
    %v147 = vpop.permute.xlu0 %146
    %v149 = vmul.f32 %v142, %v108
    %v150 = vmul.f32 %v147, %v111
    %153 = vrot.lane.b32.xlu0 %v149, 96
    %v154 = vpop.permute.xlu0 %153
    %155 = vrot.lane.b32.xlu0 %v150, 96
    %v156 = vpop.permute.xlu0 %155
    %v159 = vadd.f32 %v131, %v154
    %v160 = vadd.f32 %v132, %v156
    %vm161 = vcmp.eq.s32.totalorder %v70, 2
    %vm162 = vcmp.eq.s32.totalorder %v71, 2
    %v163 = vsel %vm161, 1, 0
    %v164 = vsel %vm162, 1, 0
    %v165 = vcvt.s32.f32 %v163
    %v166 = vcvt.s32.f32 %v164
    %168 = vset.pattern.permute.xlu0 0
    %169 = vperm.xlu0 %168, %v165
    %v170 = vpop.permute.xlu0 %169
    %173 = vset.pattern.permute.xlu0 0
    %174 = vperm.xlu0 %173, %v166
    %v175 = vpop.permute.xlu0 %174
    %v177 = vmul.f32 %v170, %v108
    %v178 = vmul.f32 %v175, %v111
    %181 = vrot.lane.b32.xlu0 %v177, 64
    %v182 = vpop.permute.xlu0 %181
    %183 = vrot.lane.b32.xlu0 %v178, 64
    %v184 = vpop.permute.xlu0 %183
    %v187 = vadd.f32 %v159, %v182
    %v188 = vadd.f32 %v160, %v184
    %v189 = vld [vmem:[#allocation6 + $0x8] sm:$0xff]
    %v190 = vld [vmem:[#allocation6 + $0x10] sm:$0xff]
    %v191 = vld [vmem:[#allocation6 + $0x18] sm:$0xff]
    %v192 = vld [vmem:[#allocation6 + $0x20] sm:$0xff]
    %v193 = vperm.slane %v80, 1
    %vm194 = vcmask 261120
    %v196 = vsel %vm194, %v187, 0
    %v199 = vsel %vm194, %v188, 0
    %201 = vmatpush.msra.mxu0 0.0
    %202 = vmatpush.msra.mxu0 0.0
    %203 = vmatpush.msra.mxu0 0.0
    %204 = vmatpush.msra.mxu0 0.0
    %205 = vmatpush.msra.mxu0 0.0
    %206 = vmatpush.msra.mxu0 0.0
    %207 = vmatpush.msra.mxu0 0.0
    %208 = vmatpush.msra.mxu0 0.0
    %209 = vmatpush.msra.mxu0 0.0
    %210 = vmatpush.msra.mxu0 0.0
    %211 = vmatpush.msra.mxu0 0.0
    %212 = vmatpush.msra.mxu0 0.0
    %213 = vmatpush.msra.mxu0 %v192
    %214 = vmatpush.msra.mxu0 %v191
    %215 = vmatpush.msra.mxu0 %v190
    %216 = vmatpush.msra.mxu0 %v189
    %217 = vmatmul.f32.gmra.mxu0 %v196
    %v218 = vpop.f32.mrf.mxu0
    %v219 = vadd.f32 %v193, %v218
    %220 = vmatmul.f32.gmra.mxu0 %v199
    %v221 = vpop.f32.mrf.mxu0
    %v222 = vadd.f32 %v193, %v221
    %223 = vdwg.mxu0
    %s224 = sld [smem:[#allocation5]]
    %v225 = vstv %s224
    %v226 = vmul.f32 %v225, %v72
    %v227 = vmul.f32 %v225, %v73
    %s228 = sld [smem:[#allocation5 + $0x1]]
    %v229 = vstv %s228
    %v230 = vmul.f32 %v229, %v74
    %v231 = vmul.f32 %v229, %v75
    %v232 = vadd.f32 %v226, %v230
    %v233 = vadd.f32 %v227, %v231
    %s234 = sld [smem:[#allocation5 + $0x2]]
    %v235 = vstv %s234
    %v236 = vmul.f32 %v235, %v76
    %v237 = vmul.f32 %v235, %v77
    %v238 = vadd.f32 %v232, %v236
    %v239 = vadd.f32 %v233, %v237
    %vm240 = vcmask 130048
    %v242 = vsel %vm240, %v238, 0
    %v245 = vsel %vm240, %v239, 0
    %247 = vmatpush.msra.mxu0 0.0
    %248 = vmatpush.msra.mxu0 0.0
    %249 = vmatpush.msra.mxu0 0.0
    %250 = vmatpush.msra.mxu0 0.0
    %251 = vmatpush.msra.mxu0 0.0
    %252 = vmatpush.msra.mxu0 0.0
    %253 = vmatpush.msra.mxu0 0.0
    %254 = vmatpush.msra.mxu0 0.0
    %255 = vmatpush.msra.mxu0 0.0
    %256 = vmatpush.msra.mxu0 0.0
    %257 = vmatpush.msra.mxu0 0.0
    %258 = vmatpush.msra.mxu0 0.0
    %259 = vmatpush.msra.mxu0 0.0
    %260 = vmatpush.msra.mxu0 0.0
    %261 = vmatpush.msra.mxu0 %v222
    %262 = vmatpush.msra.mxu0 %v219
    %263 = vmatmul.f32.gmra.mxu0 %v242
    %v264 = vpop.f32.mrf.mxu0
    %v265 = vadd.f32 0.0, %v264
    %266 = vmatmul.f32.gmra.mxu0 %v245
    %v267 = vpop.f32.mrf.mxu0
    %v268 = vadd.f32 0.0, %v267
    %269 = vdwg.mxu0
    %s270 = sld [smem:[#allocation5 + $0x4]]
    %v271 = vstv %s270
    %v272 = vmul.f32 %v271, %v72
    %v273 = vmul.f32 %v271, %v73
    %s274 = sld [smem:[#allocation5 + $0x6]]
    %v275 = vstv %s274
    %v276 = vmul.f32 %v275, %v76
    %v277 = vmul.f32 %v275, %v77
    %v278 = vadd.f32 %v272, %v276
    %v279 = vadd.f32 %v273, %v277
    %s280 = sld [smem:[#allocation5 + $0x8]]
    %v281 = vstv %s280
    %v282 = vmul.f32 %v281, %v72
    %v283 = vmul.f32 %v281, %v73
    %s284 = sld [smem:[#allocation5 + $0xa]]
    %v285 = vstv %s284
    %v286 = vmul.f32 %v285, %v76
    %v287 = vmul.f32 %v285, %v77
    %v288 = vadd.f32 %v282, %v286
    %v289 = vadd.f32 %v283, %v287
    %s290 = sld [smem:[#allocation5 + $0xb]]
    %v291 = vstv %s290
    %v292 = vmul.f32 %v291, %v78
    %v293 = vmul.f32 %v291, %v79
    %v294 = vadd.f32 %v288, %v292
    %v295 = vadd.f32 %v289, %v293
    %298 = vrot.lane.b32.xlu0 %v294, 16
    %v299 = vpop.permute.xlu0 %298
    %300 = vrot.lane.b32.xlu0 %v295, 16
    %v301 = vpop.permute.xlu0 %300
    %v304 = vsel %vm240, %v278, %v299
    %v305 = vsel %vm240, %v279, %v301
    %v307 = vsel %vm194, %v304, 0
    %v310 = vsel %vm194, %v305, 0
    %312 = vmatpush.msra.mxu0 0.0
    %313 = vmatpush.msra.mxu0 0.0
    %314 = vmatpush.msra.mxu0 0.0
    %315 = vmatpush.msra.mxu0 0.0
    %316 = vmatpush.msra.mxu0 0.0
    %317 = vmatpush.msra.mxu0 0.0
    %318 = vmatpush.msra.mxu0 0.0
    %319 = vmatpush.msra.mxu0 0.0
    %320 = vmatpush.msra.mxu0 0.0
    %321 = vmatpush.msra.mxu0 0.0
    %322 = vmatpush.msra.mxu0 0.0
    %323 = vmatpush.msra.mxu0 0.0
    %324 = vmatpush.msra.mxu0 %v222
    %325 = vmatpush.msra.mxu0 %v219
    %326 = vmatpush.msra.mxu0 %v268
    %327 = vmatpush.msra.mxu0 %v265
    %328 = vmatmul.f32.gmra.mxu0 %v307
    %v329 = vpop.f32.mrf.mxu0
    %v330 = vadd.f32 0.0, %v329
    %331 = vmatmul.f32.gmra.mxu0 %v310
    %v332 = vpop.f32.mrf.mxu0
    %v333 = vadd.f32 0.0, %v332
    %334 = vdwg.mxu0
    %v335 = vsel %vm194, %v330, 0.0
    %336 = vadd.xlane.f32.xlu0 %v335
    %v337 = vpop.xlane.xlu0 %336
    %v338 = vsel %vm194, %v333, 0.0
    %339 = vadd.xlane.f32.xlu0 %v338
    %v340 = vpop.xlane.xlu0 %339
    %v341 = vrcp.pop 32.0
    %v342 = vmul.f32 32.0, %v341
    %v343 = vsub.f32 1.0, %v342
    %v344 = vmul.f32 %v341, %v343
    %v345 = vadd.f32 %v341, %v344
    %vm346 = vweird.f32 %v341
    %v347 = vsel %vm346, %v341, %v345
    %v348 = vmul.f32 %v337, %v347
    %v349 = vmul.f32 %v340, %v347
    %v350 = vsub.f32 %v330, %v348
    %v351 = vsub.f32 %v333, %v349
    %v352 = vmul.f32 %v350, %v350
    %v353 = vmul.f32 %v351, %v351
    %v354 = vsel %vm194, %v352, 0.0
    %355 = vadd.xlane.f32.xlu0 %v354
    %v356 = vpop.xlane.xlu0 %355
    %v357 = vsel %vm194, %v353, 0.0
    %358 = vadd.xlane.f32.xlu0 %v357
    %v359 = vpop.xlane.xlu0 %358
    %v360 = vmul.f32 %v356, %v347
    %v361 = vmul.f32 %v359, %v347
    %v362 = vadd.f32 %v360, 1e-05
    %v363 = vadd.f32 %v361, 1e-05
    %v364 = vrsqrt.pop %v362
    %v365 = vmul.f32 %v364, %v362
    %v366 = vmul.f32 %v365, %v364
    %v367 = vmul.f32 0.5, %v366
    %v368 = vsub.f32 1.5, %v367
    %v369 = vmul.f32 %v364, %v368
    %vm370 = vweird.f32 %v362
    %vm371 = vweird.f32 %v364
    %vm372 = vmor %vm370, %vm371
    %v373 = vsel %vm372, %v364, %v369
    %v374 = vrsqrt.pop %v363
    %v375 = vmul.f32 %v374, %v363
    %v376 = vmul.f32 %v375, %v374
    %v377 = vmul.f32 0.5, %v376
    %v378 = vsub.f32 1.5, %v377
    %v379 = vmul.f32 %v374, %v378
    %vm380 = vweird.f32 %v363
    %vm381 = vweird.f32 %v374
    %vm382 = vmor %vm380, %vm381
    %v383 = vsel %vm382, %v374, %v379
    %v384 = vmul.f32 %v350, %v373
    %v385 = vmul.f32 %v351, %v383
    %v386 = vmul.f32 %v384, 0.5
    %v387 = vmul.f32 %v385, 0.5
    %v388 = vmul.f32 %v384, 0.70710677
    %v389 = vmul.f32 %v385, 0.70710677
    %v390 = vmul.f32 %v388, %v388
    %v391 = vmin.f32 16.0, %v390
    %v392 = vmul.f32 %v391, 2.1237322e-06
    %v393 = vadd.f32 %v392, 0.00028619796
    %v394 = vmul.f32 %v391, %v393
    %v395 = vadd.f32 %v394, 0.0036580483
    %v396 = vmul.f32 %v391, %v395
    %v397 = vadd.f32 %v396, 0.05243302
    %v398 = vmul.f32 %v391, %v397
    %v399 = vadd.f32 %v398, 0.18741608
    %v400 = vmul.f32 %v391, %v399
    %v401 = vadd.f32 %v400, 1.1283791
    %v402 = vmul.f32 %v388, %v401
    %v403 = vmul.f32 %v391, 3.8918573e-05
    %v404 = vadd.f32 %v403, 0.001143296
    %v405 = vmul.f32 %v391, %v404
    %v406 = vadd.f32 %v405, 0.014752088
    %v407 = vmul.f32 %v391, %v406
    %v408 = vadd.f32 %v407, 0.112945676
    %v409 = vmul.f32 %v391, %v408
    %v410 = vadd.f32 %v409, 0.4994258
    %v411 = vmul.f32 %v391, %v410
    %v412 = vadd.f32 %v411, 1.0
    %v413 = vrcp.pop %v412
    %v414 = vmul.f32 %v412, %v413
    %v415 = vsub.f32 1.0, %v414
    %v416 = vmul.f32 %v413, %v415
    %v417 = vadd.f32 %v413, %v416
    %vm418 = vweird.f32 %v412
    %vm419 = vweird.f32 %v413
    %vm420 = vmor %vm418, %vm419
    %v421 = vsel %vm420, %v413, %v417
    %v422 = vand.u32 2147483647, %v412
    %vm423 = vcmp.eq.f32.partialorder %v422, 8.507059e+37
    %v424 = vand.u32 %v412, 2147483648
    %v425 = vor.u32 1.1754944e-38, %v424
    %v426 = vsel %vm423, %v425, %v421
    %v427 = vmul.f32 %v402, %v426
    %v428 = vmin.f32 %v427, 1.0
    %v429 = vmax.f32 %v428, -1.0
    %v430 = vmul.f32 %v389, %v389
    %v431 = vmin.f32 16.0, %v430
    %v432 = vmul.f32 %v431, 2.1237322e-06
    %v433 = vadd.f32 %v432, 0.00028619796
    %v434 = vmul.f32 %v431, %v433
    %v435 = vadd.f32 %v434, 0.0036580483
    %v436 = vmul.f32 %v431, %v435
    %v437 = vadd.f32 %v436, 0.05243302
    %v438 = vmul.f32 %v431, %v437
    %v439 = vadd.f32 %v438, 0.18741608
    %v440 = vmul.f32 %v431, %v439
    %v441 = vadd.f32 %v440, 1.1283791
    %v442 = vmul.f32 %v389, %v441
    %v443 = vmul.f32 %v431, 3.8918573e-05
    %v444 = vadd.f32 %v443, 0.001143296
    %v445 = vmul.f32 %v431, %v444
    %v446 = vadd.f32 %v445, 0.014752088
    %v447 = vmul.f32 %v431, %v446
    %v448 = vadd.f32 %v447, 0.112945676
    %v449 = vmul.f32 %v431, %v448
    %v450 = vadd.f32 %v449, 0.4994258
    %v451 = vmul.f32 %v431, %v450
    %v452 = vadd.f32 %v451, 1.0
    %v453 = vrcp.pop %v452
    %v454 = vmul.f32 %v452, %v453
    %v455 = vsub.f32 1.0, %v454
    %v456 = vmul.f32 %v453, %v455
    %v457 = vadd.f32 %v453, %v456
    %vm458 = vweird.f32 %v452
    %vm459 = vweird.f32 %v453
    %vm460 = vmor %vm458, %vm459
    %v461 = vsel %vm460, %v453, %v457
    %v462 = vand.u32 2147483647, %v452
    %vm463 = vcmp.eq.f32.partialorder %v462, 8.507059e+37
    %v464 = vand.u32 %v452, 2147483648
    %v465 = vor.u32 1.1754944e-38, %v464
    %v466 = vsel %vm463, %v465, %v461
    %v467 = vmul.f32 %v442, %v466
    %v468 = vmin.f32 %v467, 1.0
    %v469 = vmax.f32 %v468, -1.0
    %v470 = vadd.f32 %v429, 1.0
    %v471 = vadd.f32 %v469, 1.0
    %v472 = vmul.f32 %v386, %v470
    %v473 = vmul.f32 %v387, %v471
    %s474 = sld [smem:[#allocation5 + $0xc]]
    %v475 = vstv %s474
    %v476 = vmul.f32 %v475, %v72
    %v477 = vmul.f32 %v475, %v73
    %s478 = sld [smem:[#allocation5 + $0xd]]
    %v479 = vstv %s478
    %v480 = vmul.f32 %v479, %v74
    %v481 = vmul.f32 %v479, %v75
    %v482 = vadd.f32 %v476, %v480
    %v483 = vadd.f32 %v477, %v481
    %s484 = sld [smem:[#allocation5 + $0xe]]
    %v485 = vstv %s484
    %v486 = vmul.f32 %v485, %v76
    %v487 = vmul.f32 %v485, %v77
    %v488 = vadd.f32 %v482, %v486
    %v489 = vadd.f32 %v483, %v487
    %492 = vrot.lane.b32.xlu0 %v219, 96
    %v493 = vpop.permute.xlu0 %492
    %494 = vrot.lane.b32.xlu0 %v222, 96
    %v495 = vpop.permute.xlu0 %494
    %v499 = vsel %vm240, %v488, 0
    %v502 = vsel %vm240, %v489, 0
    %504 = vmatpush.msra.mxu0 0.0
    %505 = vmatpush.msra.mxu0 0.0
    %506 = vmatpush.msra.mxu0 0.0
    %507 = vmatpush.msra.mxu0 0.0
    %508 = vmatpush.msra.mxu0 0.0
    %509 = vmatpush.msra.mxu0 0.0
    %510 = vmatpush.msra.mxu0 0.0
    %511 = vmatpush.msra.mxu0 0.0
    %512 = vmatpush.msra.mxu0 0.0
    %513 = vmatpush.msra.mxu0 0.0
    %514 = vmatpush.msra.mxu0 0.0
    %515 = vmatpush.msra.mxu0 0.0
    %516 = vmatpush.msra.mxu0 0.0
    %517 = vmatpush.msra.mxu0 0.0
    %518 = vmatpush.msra.mxu0 %v495
    %519 = vmatpush.msra.mxu0 %v493
    %520 = vmatmul.f32.gmra.mxu0 %v499
    %v521 = vpop.f32.mrf.mxu0
    %v522 = vadd.f32 0.0, %v521
    %523 = vmatmul.f32.gmra.mxu0 %v502
    %v524 = vpop.f32.mrf.mxu0
    %v525 = vadd.f32 0.0, %v524
    %526 = vdwg.mxu0
    %s527 = sld [smem:[#allocation5 + $0x10]]
    %v528 = vstv %s527
    %v529 = vmul.f32 %v528, %v72
    %v530 = vmul.f32 %v528, %v73
    %s531 = sld [smem:[#allocation5 + $0x11]]
    %v532 = vstv %s531
    %v533 = vmul.f32 %v532, %v74
    %v534 = vmul.f32 %v532, %v75
    %v535 = vadd.f32 %v529, %v533
    %v536 = vadd.f32 %v530, %v534
    %s537 = sld [smem:[#allocation5 + $0x12]]
    %v538 = vstv %s537
    %v539 = vmul.f32 %v538, %v76
    %v540 = vmul.f32 %v538, %v77
    %v541 = vadd.f32 %v535, %v539
    %v542 = vadd.f32 %v536, %v540
    %s543 = sld [smem:[#allocation5 + $0x14]]
    %v544 = vstv %s543
    %v545 = vmul.f32 %v544, %v72
    %v546 = vmul.f32 %v544, %v73
    %s547 = sld [smem:[#allocation5 + $0x15]]
    %v548 = vstv %s547
    %v549 = vmul.f32 %v548, %v74
    %v550 = vmul.f32 %v548, %v75
    %v551 = vadd.f32 %v545, %v549
    %v552 = vadd.f32 %v546, %v550
    %s553 = sld [smem:[#allocation5 + $0x16]]
    %v554 = vstv %s553
    %v555 = vmul.f32 %v554, %v76
    %v556 = vmul.f32 %v554, %v77
    %v557 = vadd.f32 %v551, %v555
    %v558 = vadd.f32 %v552, %v556
    %s559 = sld [smem:[#allocation5 + $0x17]]
    %v560 = vstv %s559
    %v561 = vmul.f32 %v560, %v78
    %v562 = vmul.f32 %v560, %v79
    %v563 = vadd.f32 %v557, %v561
    %v564 = vadd.f32 %v558, %v562
    %567 = vrot.lane.b32.xlu0 %v563, 16
    %v568 = vpop.permute.xlu0 %567
    %569 = vrot.lane.b32.xlu0 %v564, 16
    %v570 = vpop.permute.xlu0 %569
    %v573 = vsel %vm240, %v541, %v568
    %v574 = vsel %vm240, %v542, %v570
    %v576 = vsel %vm194, %v573, 0
    %v579 = vsel %vm194, %v574, 0
    %581 = vmatpush.msra.mxu0 0.0
    %582 = vmatpush.msra.mxu0 0.0
    %583 = vmatpush.msra.mxu0 0.0
    %584 = vmatpush.msra.mxu0 0.0
    %585 = vmatpush.msra.mxu0 0.0
    %586 = vmatpush.msra.mxu0 0.0
    %587 = vmatpush.msra.mxu0 0.0
    %588 = vmatpush.msra.mxu0 0.0
    %589 = vmatpush.msra.mxu0 0.0
    %590 = vmatpush.msra.mxu0 0.0
    %591 = vmatpush.msra.mxu0 0.0
    %592 = vmatpush.msra.mxu0 0.0
    %593 = vmatpush.msra.mxu0 %v495
    %594 = vmatpush.msra.mxu0 %v493
    %595 = vmatpush.msra.mxu0 %v525
    %596 = vmatpush.msra.mxu0 %v522
    %597 = vmatmul.f32.gmra.mxu0 %v576
    %v598 = vpop.f32.mrf.mxu0
    %v599 = vadd.f32 0.0, %v598
    %600 = vmatmul.f32.gmra.mxu0 %v579
    %v601 = vpop.f32.mrf.mxu0
    %v602 = vadd.f32 0.0, %v601
    %603 = vdwg.mxu0
    %s604 = sld [smem:[#allocation5 + $0x18]]
    %v605 = vstv %s604
    %v606 = vmul.f32 %v605, %v72
    %v607 = vmul.f32 %v605, %v73
    %s608 = sld [smem:[#allocation5 + $0x1a]]
    %v609 = vstv %s608
    %v610 = vmul.f32 %v609, %v76
    %v611 = vmul.f32 %v609, %v77
    %v612 = vadd.f32 %v606, %v610
    %v613 = vadd.f32 %v607, %v611
    %s614 = sld [smem:[#allocation5 + $0x1c]]
    %v615 = vstv %s614
    %v616 = vmul.f32 %v615, %v72
    %v617 = vmul.f32 %v615, %v73
    %s618 = sld [smem:[#allocation5 + $0x1e]]
    %v619 = vstv %s618
    %v620 = vmul.f32 %v619, %v76
    %v621 = vmul.f32 %v619, %v77
    %v622 = vadd.f32 %v616, %v620
    %v623 = vadd.f32 %v617, %v621
    %s624 = sld [smem:[#allocation5 + $0x1f]]
    %v625 = vstv %s624
    %v626 = vmul.f32 %v625, %v78
    %v627 = vmul.f32 %v625, %v79
    %v628 = vadd.f32 %v622, %v626
    %v629 = vadd.f32 %v623, %v627
    %s630 = sld [smem:[#allocation5 + $0x20]]
    %v631 = vstv %s630
    %v632 = vmul.f32 %v631, %v72
    %v633 = vmul.f32 %v631, %v73
    %s634 = sld [smem:[#allocation5 + $0x22]]
    %v635 = vstv %s634
    %v636 = vmul.f32 %v635, %v76
    %v637 = vmul.f32 %v635, %v77
    %v638 = vadd.f32 %v632, %v636
    %v639 = vadd.f32 %v633, %v637
    %s640 = sld [smem:[#allocation5 + $0x23]]
    %v641 = vstv %s640
    %v642 = vmul.f32 %v641, %v78
    %v643 = vmul.f32 %v641, %v79
    %v644 = vadd.f32 %v638, %v642
    %v645 = vadd.f32 %v639, %v643
    %648 = vrot.lane.b32.xlu0 %v628, 16
    %v649 = vpop.permute.xlu0 %648
    %650 = vrot.lane.b32.xlu0 %v629, 16
    %v651 = vpop.permute.xlu0 %650
    %656 = vrot.lane.b32.xlu0 %v644, 32
    %v657 = vpop.permute.xlu0 %656
    %658 = vrot.lane.b32.xlu0 %v645, 32
    %v659 = vpop.permute.xlu0 %658
    %v662 = vsel %vm240, %v612, %v649
    %v663 = vsel %vm240, %v613, %v651
    %v664 = vsel %vm194, %v662, %v657
    %v665 = vsel %vm194, %v663, %v659
    %vm666 = vcmask 392192
    %v668 = vsel %vm666, %v664, 0
    %v671 = vsel %vm666, %v665, 0
    %673 = vmatpush.msra.mxu0 0.0
    %674 = vmatpush.msra.mxu0 0.0
    %675 = vmatpush.msra.mxu0 0.0
    %676 = vmatpush.msra.mxu0 0.0
    %677 = vmatpush.msra.mxu0 0.0
    %678 = vmatpush.msra.mxu0 0.0
    %679 = vmatpush.msra.mxu0 0.0
    %680 = vmatpush.msra.mxu0 0.0
    %681 = vmatpush.msra.mxu0 0.0
    %682 = vmatpush.msra.mxu0 0.0
    %683 = vmatpush.msra.mxu0 %v525
    %684 = vmatpush.msra.mxu0 %v522
    %685 = vmatpush.msra.mxu0 %v495
    %686 = vmatpush.msra.mxu0 %v493
    %687 = vmatpush.msra.mxu0 %v602
    %688 = vmatpush.msra.mxu0 %v599
    %689 = vmatmul.f32.gmra.mxu0 %v668
    %v690 = vpop.f32.mrf.mxu0
    %v691 = vadd.f32 0.0, %v690
    %692 = vmatmul.f32.gmra.mxu0 %v671
    %v693 = vpop.f32.mrf.mxu0
    %v694 = vadd.f32 0.0, %v693
    %695 = vdwg.mxu0
    %v696 = vsel %vm194, %v691, 0.0
    %697 = vadd.xlane.f32.xlu0 %v696
    %v698 = vpop.xlane.xlu0 %697
    %v699 = vsel %vm194, %v694, 0.0
    %700 = vadd.xlane.f32.xlu0 %v699
    %v701 = vpop.xlane.xlu0 %700
    %v702 = vmul.f32 %v698, %v347
    %v703 = vmul.f32 %v701, %v347
    %v704 = vsub.f32 %v691, %v702
    %v705 = vsub.f32 %v694, %v703
    %v706 = vmul.f32 %v704, %v704
    %v707 = vmul.f32 %v705, %v705
    %v708 = vsel %vm194, %v706, 0.0
    %709 = vadd.xlane.f32.xlu0 %v708
    %v710 = vpop.xlane.xlu0 %709
    %v711 = vsel %vm194, %v707, 0.0
    %712 = vadd.xlane.f32.xlu0 %v711
    %v713 = vpop.xlane.xlu0 %712
    %v714 = vmul.f32 %v710, %v347
    %v715 = vmul.f32 %v713, %v347
    %v716 = vadd.f32 %v714, 1e-05
    %v717 = vadd.f32 %v715, 1e-05
    %v718 = vrsqrt.pop %v716
    %v719 = vmul.f32 %v718, %v716
    %v720 = vmul.f32 %v719, %v718
    %v721 = vmul.f32 0.5, %v720
    %v722 = vsub.f32 1.5, %v721
    %v723 = vmul.f32 %v718, %v722
    %vm724 = vweird.f32 %v716
    %vm725 = vweird.f32 %v718
    %vm726 = vmor %vm724, %vm725
    %v727 = vsel %vm726, %v718, %v723
    %v728 = vrsqrt.pop %v717
    %v729 = vmul.f32 %v728, %v717
    %v730 = vmul.f32 %v729, %v728
    %v731 = vmul.f32 0.5, %v730
    %v732 = vsub.f32 1.5, %v731
    %v733 = vmul.f32 %v728, %v732
    %vm734 = vweird.f32 %v717
    %vm735 = vweird.f32 %v728
    %vm736 = vmor %vm734, %vm735
    %v737 = vsel %vm736, %v728, %v733
    %v738 = vmul.f32 %v704, %v727
    %v739 = vmul.f32 %v705, %v737
    %v740 = vmul.f32 %v738, 0.5
    %v741 = vmul.f32 %v739, 0.5
    %v742 = vmul.f32 %v738, 0.70710677
    %v743 = vmul.f32 %v739, 0.70710677
    %v744 = vmul.f32 %v742, %v742
    %v745 = vmin.f32 16.0, %v744
    %v746 = vmul.f32 %v745, 2.1237322e-06
    %v747 = vadd.f32 %v746, 0.00028619796
    %v748 = vmul.f32 %v745, %v747
    %v749 = vadd.f32 %v748, 0.0036580483
    %v750 = vmul.f32 %v745, %v749
    %v751 = vadd.f32 %v750, 0.05243302
    %v752 = vmul.f32 %v745, %v751
    %v753 = vadd.f32 %v752, 0.18741608
    %v754 = vmul.f32 %v745, %v753
    %v755 = vadd.f32 %v754, 1.1283791
    %v756 = vmul.f32 %v742, %v755
    %v757 = vmul.f32 %v745, 3.8918573e-05
    %v758 = vadd.f32 %v757, 0.001143296
    %v759 = vmul.f32 %v745, %v758
    %v760 = vadd.f32 %v759, 0.014752088
    %v761 = vmul.f32 %v745, %v760
    %v762 = vadd.f32 %v761, 0.112945676
    %v763 = vmul.f32 %v745, %v762
    %v764 = vadd.f32 %v763, 0.4994258
    %v765 = vmul.f32 %v745, %v764
    %v766 = vadd.f32 %v765, 1.0
    %v767 = vrcp.pop %v766
    %v768 = vmul.f32 %v766, %v767
    %v769 = vsub.f32 1.0, %v768
    %v770 = vmul.f32 %v767, %v769
    %v771 = vadd.f32 %v767, %v770
    %vm772 = vweird.f32 %v766
    %vm773 = vweird.f32 %v767
    %vm774 = vmor %vm772, %vm773
    %v775 = vsel %vm774, %v767, %v771
    %v776 = vand.u32 2147483647, %v766
    %vm777 = vcmp.eq.f32.partialorder %v776, 8.507059e+37
    %v778 = vand.u32 %v766, 2147483648
    %v779 = vor.u32 1.1754944e-38, %v778
    %v780 = vsel %vm777, %v779, %v775
    %v781 = vmul.f32 %v756, %v780
    %v782 = vmin.f32 %v781, 1.0
    %v783 = vmax.f32 %v782, -1.0
    %v784 = vmul.f32 %v743, %v743
    %v785 = vmin.f32 16.0, %v784
    %v786 = vmul.f32 %v785, 2.1237322e-06
    %v787 = vadd.f32 %v786, 0.00028619796
    %v788 = vmul.f32 %v785, %v787
    %v789 = vadd.f32 %v788, 0.0036580483
    %v790 = vmul.f32 %v785, %v789
    %v791 = vadd.f32 %v790, 0.05243302
    %v792 = vmul.f32 %v785, %v791
    %v793 = vadd.f32 %v792, 0.18741608
    %v794 = vmul.f32 %v785, %v793
    %v795 = vadd.f32 %v794, 1.1283791
    %v796 = vmul.f32 %v743, %v795
    %v797 = vmul.f32 %v785, 3.8918573e-05
    %v798 = vadd.f32 %v797, 0.001143296
    %v799 = vmul.f32 %v785, %v798
    %v800 = vadd.f32 %v799, 0.014752088
    %v801 = vmul.f32 %v785, %v800
    %v802 = vadd.f32 %v801, 0.112945676
    %v803 = vmul.f32 %v785, %v802
    %v804 = vadd.f32 %v803, 0.4994258
    %v805 = vmul.f32 %v785, %v804
    %v806 = vadd.f32 %v805, 1.0
    %v807 = vrcp.pop %v806
    %v808 = vmul.f32 %v806, %v807
    %v809 = vsub.f32 1.0, %v808
    %v810 = vmul.f32 %v807, %v809
    %v811 = vadd.f32 %v807, %v810
    %vm812 = vweird.f32 %v806
    %vm813 = vweird.f32 %v807
    %vm814 = vmor %vm812, %vm813
    %v815 = vsel %vm814, %v807, %v811
    %v816 = vand.u32 2147483647, %v806
    %vm817 = vcmp.eq.f32.partialorder %v816, 8.507059e+37
    %v818 = vand.u32 %v806, 2147483648
    %v819 = vor.u32 1.1754944e-38, %v818
    %v820 = vsel %vm817, %v819, %v815
    %v821 = vmul.f32 %v796, %v820
    %v822 = vmin.f32 %v821, 1.0
    %v823 = vmax.f32 %v822, -1.0
    %v824 = vadd.f32 %v783, 1.0
    %v825 = vadd.f32 %v823, 1.0
    %v826 = vmul.f32 %v740, %v824
    %v827 = vmul.f32 %v741, %v825
    %v828 = vld [vmem:[#allocation6 + $0x28] sm:$0xff]
    %v829 = vld [vmem:[#allocation6 + $0x30] sm:$0xff]
    %v830 = vld [vmem:[#allocation6 + $0x38] sm:$0xff]
    %v831 = vld [vmem:[#allocation6 + $0x40] sm:$0xff]
    %v832 = vperm.slane %v80, 2
    %v834 = vsel %vm194, %v472, 0
    %v837 = vsel %vm194, %v473, 0
    %v840 = vsel %vm194, %v826, 0
    %v843 = vsel %vm194, %v827, 0
    %845 = vmatpush.msra.mxu0 0.0
    %846 = vmatpush.msra.mxu0 0.0
    %847 = vmatpush.msra.mxu0 0.0
    %848 = vmatpush.msra.mxu0 0.0
    %849 = vmatpush.msra.mxu0 0.0
    %850 = vmatpush.msra.mxu0 0.0
    %851 = vmatpush.msra.mxu0 0.0
    %852 = vmatpush.msra.mxu0 0.0
    %853 = vmatpush.msra.mxu0 0.0
    %854 = vmatpush.msra.mxu0 0.0
    %855 = vmatpush.msra.mxu0 0.0
    %856 = vmatpush.msra.mxu0 0.0
    %857 = vmatpush.msra.mxu0 %v831
    %858 = vmatpush.msra.mxu0 %v830
    %859 = vmatpush.msra.mxu0 %v829
    %860 = vmatpush.msra.mxu0 %v828
    %861 = vmatmul.f32.gmra.mxu0 %v834
    %v862 = vpop.f32.mrf.mxu0
    %v863 = vadd.f32 %v832, %v862
    %864 = vmatmul.f32.gmra.mxu0 %v837
    %v865 = vpop.f32.mrf.mxu0
    %v866 = vadd.f32 %v832, %v865
    %867 = vmatmul.f32.gmra.mxu0 %v840
    %v868 = vpop.f32.mrf.mxu0
    %v869 = vadd.f32 %v832, %v868
    %870 = vmatmul.f32.gmra.mxu0 %v843
    %v871 = vpop.f32.mrf.mxu0
    %v872 = vadd.f32 %v832, %v871
    %873 = vdwg.mxu0
    %v874 = vtanh.pop %v863
    %v875 = vtanh.pop %v866
    %v876 = vtanh.pop %v869
    %v877 = vtanh.pop %v872
    %v878 = vperm.slane %v80, 3
    %v879 = vmul.f32 %v874, %v878
    %v880 = vmul.f32 %v875, %v878
    %v881 = vmul.f32 %v876, %v878
    %v882 = vmul.f32 %v877, %v878
    %v883 = vsel %vm240, %v879, 0.0
    %884 = vadd.xlane.f32.xlu0 %v883
    %v885 = vpop.xlane.xlu0 %884
    %v886 = vsel %vm240, %v880, 0.0
    %887 = vadd.xlane.f32.xlu0 %v886
    %v888 = vpop.xlane.xlu0 %887
    %v889 = vsel %vm240, %v881, 0.0
    %890 = vadd.xlane.f32.xlu0 %v889
    %v891 = vpop.xlane.xlu0 %890
    %v892 = vsel %vm240, %v882, 0.0
    %893 = vadd.xlane.f32.xlu0 %v892
    %v894 = vpop.xlane.xlu0 %893
    %v895 = vperm.slane %v80, 4
    %v896 = vadd.f32 %v885, %v895
    %v897 = vadd.f32 %v888, %v895
    %v898 = vadd.f32 %v891, %v895
    %v899 = vadd.f32 %v894, %v895
    %v900 = vmax.f32 %v896, %v898
    %v901 = vmax.f32 %v897, %v899
    %v902 = vsub.f32 %v896, %v900
    %v903 = vsub.f32 %v897, %v901
    %v904 = vmul.f32 %v902, 1.442695
    %v905 = vpow.pop %v904
    %v906 = vmul.f32 %v903, 1.442695
    %v907 = vpow.pop %v906
    %v908 = vsub.f32 %v898, %v900
    %v909 = vsub.f32 %v899, %v901
    %v910 = vmul.f32 %v908, 1.442695
    %v911 = vpow.pop %v910
    %v912 = vmul.f32 %v909, 1.442695
    %v913 = vpow.pop %v912
    %915 = vset.pattern.permute.xlu0 0
    %916 = vperm.xlu0 %915, %v905
    %v917 = vpop.permute.xlu0 %916
    %920 = vset.pattern.permute.xlu0 0
    %921 = vperm.xlu0 %920, %v907
    %v922 = vpop.permute.xlu0 %921
    %v924 = vmul.f32 %v917, %v472
    %v925 = vmul.f32 %v922, %v473
    %927 = vset.pattern.permute.xlu0 0
    %928 = vperm.xlu0 %927, %v911
    %v929 = vpop.permute.xlu0 %928
    %932 = vset.pattern.permute.xlu0 0
    %933 = vperm.xlu0 %932, %v913
    %v934 = vpop.permute.xlu0 %933
    %v936 = vmul.f32 %v929, %v826
    %v937 = vmul.f32 %v934, %v827
    %v938 = vadd.f32 %v924, %v936
    %v939 = vadd.f32 %v925, %v937
    %v940 = vadd.f32 %v905, %v911
    %v941 = vadd.f32 %v907, %v913
    %943 = vset.pattern.permute.xlu0 0
    %944 = vperm.xlu0 %943, %v940
    %v945 = vpop.permute.xlu0 %944
    %948 = vset.pattern.permute.xlu0 0
    %949 = vperm.xlu0 %948, %v941
    %v950 = vpop.permute.xlu0 %949
    %v952 = vrcp.pop %v945
    %v953 = vmul.f32 %v945, %v952
    %v954 = vsub.f32 1.0, %v953
    %v955 = vmul.f32 %v952, %v954
    %v956 = vadd.f32 %v952, %v955
    %vm957 = vweird.f32 %v945
    %vm958 = vweird.f32 %v952
    %vm959 = vmor %vm957, %vm958
    %v960 = vsel %vm959, %v952, %v956
    %v961 = vand.u32 2147483647, %v945
    %vm962 = vcmp.eq.f32.partialorder %v961, 8.507059e+37
    %v963 = vand.u32 %v945, 2147483648
    %v964 = vor.u32 1.1754944e-38, %v963
    %v965 = vsel %vm962, %v964, %v960
    %v966 = vmul.f32 %v938, %v965
    %v967 = vrcp.pop %v950
    %v968 = vmul.f32 %v950, %v967
    %v969 = vsub.f32 1.0, %v968
    %v970 = vmul.f32 %v967, %v969
    %v971 = vadd.f32 %v967, %v970
    %vm972 = vweird.f32 %v950
    %vm973 = vweird.f32 %v967
    %vm974 = vmor %vm972, %vm973
    %v975 = vsel %vm974, %v967, %v971
    %v976 = vand.u32 2147483647, %v950
    %vm977 = vcmp.eq.f32.partialorder %v976, 8.507059e+37
    %v978 = vand.u32 %v950, 2147483648
    %v979 = vor.u32 1.1754944e-38, %v978
    %v980 = vsel %vm977, %v979, %v975
    %v981 = vmul.f32 %v939, %v980
    %v982 = vld [vmem:[#allocation6 + $0x48] sm:$0xff]
    %v983 = vld [vmem:[#allocation6 + $0x50] sm:$0xff]
    %v984 = vld [vmem:[#allocation6 + $0x58] sm:$0xff]
    %v985 = vld [vmem:[#allocation6 + $0x60] sm:$0xff]
    %v986 = vperm.slane %v80, 5
    %v988 = vsel %vm194, %v966, 0
    %v991 = vsel %vm194, %v981, 0
    %993 = vmatpush.msra.mxu0 0.0
    %994 = vmatpush.msra.mxu0 0.0
    %995 = vmatpush.msra.mxu0 0.0
    %996 = vmatpush.msra.mxu0 0.0
    %997 = vmatpush.msra.mxu0 0.0
    %998 = vmatpush.msra.mxu0 0.0
    %999 = vmatpush.msra.mxu0 0.0
    %1000 = vmatpush.msra.mxu0 0.0
    %1001 = vmatpush.msra.mxu0 0.0
    %1002 = vmatpush.msra.mxu0 0.0
    %1003 = vmatpush.msra.mxu0 0.0
    %1004 = vmatpush.msra.mxu0 0.0
    %1005 = vmatpush.msra.mxu0 %v985
    %1006 = vmatpush.msra.mxu0 %v984
    %1007 = vmatpush.msra.mxu0 %v983
    %1008 = vmatpush.msra.mxu0 %v982
    %1009 = vmatmul.f32.gmra.mxu0 %v988
    %v1010 = vpop.f32.mrf.mxu0
    %v1011 = vadd.f32 %v986, %v1010
    %1012 = vmatmul.f32.gmra.mxu0 %v991
    %v1013 = vpop.f32.mrf.mxu0
    %v1014 = vadd.f32 %v986, %v1013
    %1015 = vdwg.mxu0
    %vm1016 = vcmask 39936
    %1017 = vst.msk [vmem:[%s6] sm:$0xff] %vm1016, %v1011
    %1018 = vst.msk [vmem:[%s6 + $0x8] sm:$0xff] %vm1016, %v1014
    // Predicated region
    $region38: #{model_forward.1} parent=1 // pred_check
      _
    $region39: #{model_forward.1} parent=1 // pred_check_branch
      %1020 = sbr.rel (0) target = $region41
    $region40: #{model_forward.1} parent=1 // pred_region
      _
    $region41: #{model_forward.1} parent=1 // pred_fallthru
      _
    // Predicated region
    $region42: #{model_forward.1} parent=1 // pred_check
      _
    $region43: #{model_forward.1} parent=1 // pred_check_branch
      %1022 = sbr.rel (0) target = $region45
    $region44: #{model_forward.1} parent=1 // pred_region
      _
    $region45: #{model_forward.1} parent=1 // pred_fallthru
      _
    %1023 = vsyncpa [#allocation3], 1
    %1024 = vsyncpa [#allocation7], 1
    %1025 = vsyncpa [#allocation4], 1

</llo_original>
